<compile_context>
chip_gen: v7x
topology: tpu7x:2x2x1
jax: 0.10.0
libtpu: 0.0.40
codegen_flags: <defaults>
</compile_context>

<pallas_src>
import math

import jax
import jax.numpy as jnp
from jax import lax
from jax.experimental import pallas as pl
from jax.experimental.pallas import tpu as pltpu

MASK_FILL = -1e9  # matches torch masked_fill(mask, -1000000000.0)


def _pick_tq_tile(tq_total: int, target: int = 512) -> int:
    """Largest tile <= target that divides Tq and is a multiple of 8 (else full Tq)."""
    if tq_total <= target:
        return tq_total
    for cand in (512, 384, 256, 128, 64, 32, 16, 8):
        if cand <= target and tq_total % cand == 0:
            return cand
    return tq_total


def _make_kernel(n_head: int, d_head: int, has_mask: bool, mxu_dtype):
    scale = 1.0 / math.sqrt(d_head)

    def kernel(*refs):
        if has_mask:
            (q_ref, k_ref, v_ref, mask_ref,
             wq_ref, bq_ref, wk_ref, bk_ref, wv_ref, bv_ref, wh_ref,
             out_ref, attn_ref) = refs
        else:
            (q_ref, k_ref, v_ref,
             wq_ref, bq_ref, wk_ref, bk_ref, wv_ref, bv_ref, wh_ref,
             out_ref, attn_ref) = refs
            mask_ref = None

        q = q_ref[0]          # (tq, D)  -- current Tq tile
        k = k_ref[0]          # (Tk, D)
        v = v_ref[0]          # (Tk, D)

        # Stacked per-head Q/K projections and the shared V projection: one MXU
        # matmul each (not nHead tiny ones). f32 accumulation always.
        qs = (jnp.dot(q, wq_ref[...], preferred_element_type=jnp.float32)
              + bq_ref[...].astype(jnp.float32))                     # (tq, D)
        ks = (jnp.dot(k, wk_ref[...], preferred_element_type=jnp.float32)
              + bk_ref[...].astype(jnp.float32))                     # (Tk, D)
        vs = (jnp.dot(v, wv_ref[...], preferred_element_type=jnp.float32)
              + bv_ref[...].astype(jnp.float32))                     # (Tk, dV)

        if has_mask:
            masked = mask_ref[0] != 0                                # (tq, Tk) bool

        attn_heads = []
        attn_sum = None
        for h in range(n_head):          # static unroll; nHead is small
            qh = qs[:, h * d_head:(h + 1) * d_head].astype(mxu_dtype)
            kh = ks[:, h * d_head:(h + 1) * d_head].astype(mxu_dtype)
            scores = lax.dot_general(
                qh, kh, (((1,), (1,)), ((), ())),
                preferred_element_type=jnp.float32) * scale          # (tq, Tk)
            if has_mask:
                scores = jnp.where(masked, MASK_FILL, scores)
            # Numerically stable softmax over keys; divide replaced by EUP recip.
            m = jnp.max(scores, axis=-1, keepdims=True)
            e = jnp.exp(scores - m)
            denom = jnp.sum(e, axis=-1, keepdims=True)
            attn_h = e * pl.reciprocal(denom, approx=True)
            attn_heads.append(attn_h.astype(attn_ref.dtype))
            attn_sum = attn_h if attn_sum is None else attn_sum + attn_h

        # Single store in PyTorch layout (tq, nHead, Tk); lane axis (Tk) stays dense.
        attn_ref[0] = jnp.stack(attn_heads, axis=1)

        # mean_h(attn_h @ vs) == (mean_h attn_h) @ vs because vs is head-shared:
        # replaces nHead narrow PV matmuls with one matmul on the averaged weights.
        attn_mean = (attn_sum * (1.0 / n_head)).astype(mxu_dtype)    # (tq, Tk)
        head_mean = jnp.dot(attn_mean, vs.astype(mxu_dtype),
                            preferred_element_type=jnp.float32)      # (tq, dV)
        out = jnp.dot(head_mean.astype(mxu_dtype), wh_ref[...],
                      preferred_element_type=jnp.float32)            # (tq, D)
        out_ref[0] = out.astype(out_ref.dtype)

    return kernel


def interpretable_mha(q, k, v, params, *, n_head: int, mask=None, tq_tile: int = 512):
    """Forward of interpretableMultiHeadAttention (dropout p=0 -> identity).

    q, k, v : (B, Tq|Tk, dModel)
    params  : (wq, bq, wk, bk, wv, bv, wh) with
              wq, wk : (dModel, nHead*dHead)  -- per-head projections stacked on columns
              bq, bk : (nHead*dHead,)
              wv     : (dModel, dHead), bv : (dHead,)
              wh     : (dHead, dModel)        -- wH, no bias
              (equivalent to torch Linear with weight = W.T)
    mask    : optional (B, Tq, Tk) bool/int, nonzero/True = masked (filled with -1e9)
    Returns (out (B, Tq, dModel), attn (B, Tq, nHead, Tk), attn dtype == q.dtype).
    """
    wq, bq, wk, bk, wv, bv, wh = params
    B, Tq, D = q.shape
    Tk = k.shape[1]
    d_head = D // n_head
    assert n_head * d_head == D, "dModel must be divisible by nHead"

    in_dtype = q.dtype
    # bf16 MXU operands (f32 accumulation) when inputs are bf16; f32 otherwise.
    mxu_dtype = jnp.bfloat16 if in_dtype == jnp.bfloat16 else jnp.float32
    attn_dtype = in_dtype

    tq = _pick_tq_tile(Tq, tq_tile)
    n_tq = Tq // tq

    has_mask = mask is not None
    kernel = _make_kernel(n_head, d_head, has_mask, mxu_dtype)

    inputs = [q, k, v]
    in_specs = [
        pl.BlockSpec((1, tq, D), lambda b, i: (b, i, 0)),
        pl.BlockSpec((1, Tk, D), lambda b, i: (b, 0, 0)),   # invariant across Tq tiles
        pl.BlockSpec((1, Tk, D), lambda b, i: (b, 0, 0)),
    ]
    if has_mask:
        inputs.append(mask.astype(jnp.int8))                # 4x less DMA than f32
        in_specs.append(pl.BlockSpec((1, tq, Tk), lambda b, i: (b, i, 0)))

    # Grid-invariant weights (index_map always (0, 0) -> fetched once), shipped in
    # the input dtype so bf16 callers halve weight DMA/VMEM.
    weights = [wq, bq.reshape(1, -1), wk, bk.reshape(1, -1),
               wv, bv.reshape(1, -1), wh]
    for w_arr in weights:
        w_arr = w_arr.astype(in_dtype)
        inputs.append(w_arr)
        in_specs.append(pl.BlockSpec(w_arr.shape, lambda b, i: (0, 0)))

    out_shape = (
        jax.ShapeDtypeStruct((B, Tq, D), in_dtype),
        jax.ShapeDtypeStruct((B, Tq, n_head, Tk), attn_dtype),  # PyTorch layout
    )
    out_specs = [
        pl.BlockSpec((1, tq, D), lambda b, i: (b, i, 0)),
        pl.BlockSpec((1, tq, n_head, Tk), lambda b, i: (b, i, 0, 0)),
    ]

    # Rough per-step VMEM sizing -> explicit vmem_limit_bytes, clamped to the
    # physical capacity of this generation (v7x 64 MiB vs v5e/v6e 128 MiB).
    in_b = jnp.dtype(in_dtype).itemsize
    attn_b = jnp.dtype(attn_dtype).itemsize
    blocks = 2 * (tq * D * in_b + 2 * Tk * D * in_b + tq * D * in_b
                  + tq * n_head * Tk * attn_b)
    if has_mask:
        blocks += 2 * tq * Tk  # int8
    w_bytes = 2 * in_b * (2 * (D * D + D) + D * d_head + d_head + d_head * D)
    interm = 4 * (3 * tq * D + 2 * Tk * D + 4 * tq * Tk + 2 * tq * n_head * Tk)
    est = blocks + w_bytes + interm
    try:
        info = pltpu.get_tpu_info()
        vmem_cap = getattr(info, "vmem_capacity_bytes", 64 * 1024 * 1024)
    except Exception:  # pragma: no cover - conservative fallback off-TPU
        vmem_cap = 64 * 1024 * 1024
    vmem_limit = int(min(max(2 * est, 32 * 1024 * 1024),
                         max(32 * 1024 * 1024, vmem_cap - 16 * 1024 * 1024)))

    out, attn = pl.pallas_call(
        kernel,
        out_shape=out_shape,
        grid_spec=pltpu.PrefetchScalarGridSpec(
            num_scalar_prefetch=0,
            grid=(B, n_tq),
            in_specs=in_specs,
            out_specs=out_specs,
        ),
        compiler_params=pltpu.CompilerParams(
            dimension_semantics=("parallel", "parallel"),
            vmem_limit_bytes=vmem_limit),
    )(*inputs)
    return out, attn


def _reference(q, k, v, params, *, n_head: int, mask=None):
    """Pure-JAX reference mirroring the PyTorch forward."""
    wq, bq, wk, bk, wv, bv, wh = params
    D = q.shape[-1]
    d_head = D // n_head
    scale = 1.0 / math.sqrt(d_head)
    qs = jnp.einsum("btd,de->bte", q, wq) + bq
    ks = jnp.einsum("btd,de->bte", k, wk) + bk
    vs = jnp.einsum("btd,de->bte", v, wv) + bv
    heads, attns = [], []
    for h in range(n_head):
        qh = qs[..., h * d_head:(h + 1) * d_head]
        kh = ks[..., h * d_head:(h + 1) * d_head]
        scores = jnp.einsum("bqd,bkd->bqk", qh, kh) * scale
        if mask is not None:
            scores = jnp.where(mask, MASK_FILL, scores)
        attn = jax.nn.softmax(scores, axis=-1)
        heads.append(jnp.einsum("bqk,bkd->bqd", attn, vs))
        attns.append(attn)
    head_mean = jnp.mean(jnp.stack(heads, axis=2), axis=2)
    out = jnp.einsum("btd,de->bte", head_mean, wh)
    return out, jnp.stack(attns, axis=2)


if __name__ == "__main__":
    key = jax.random.PRNGKey(0)
    ks_ = jax.random.split(key, 10)

    B, T, d_model, n_head = 2, 8, 32, 4
    d_head = d_model // n_head

    q = jax.random.normal(ks_[0], (B, T, d_model), dtype=jnp.float32)
    k = jax.random.normal(ks_[1], (B, T, d_model), dtype=jnp.float32)
    v = jax.random.normal(ks_[2], (B, T, d_model), dtype=jnp.float32)

    # Deterministic synthetic parameters (xavier init replaced by scaled normals;
    # small nonzero biases so the bias-add path is exercised).
    s = 0.2
    wq = s * jax.random.normal(ks_[3], (d_model, d_model), dtype=jnp.float32)
    wk = s * jax.random.normal(ks_[4], (d_model, d_model), dtype=jnp.float32)
    wv = s * jax.random.normal(ks_[5], (d_model, d_head), dtype=jnp.float32)
    wh = s * jax.random.normal(ks_[6], (d_head, d_model), dtype=jnp.float32)
    bq = 0.05 * jax.random.normal(ks_[7], (d_model,), dtype=jnp.float32)
    bk = 0.05 * jax.random.normal(ks_[8], (d_model,), dtype=jnp.float32)
    bv = 0.05 * jax.random.normal(ks_[9], (d_head,), dtype=jnp.float32)
    params = (wq, bq, wk, bk, wv, bv, wh)

    # Tolerance: 5e-3 absorbs the approx (EUP) reciprocal in the softmax and the
    # fp-reordering from the mean_h(attn)@vs restructuring; math is otherwise exact.
    TOL = 5e-3

    # mask=None path (matches the module's default forward call).
    out, attn = interpretable_mha(q, k, v, params, n_head=n_head)
    out, attn = jax.block_until_ready((out, attn))
    ref_out, ref_attn = _reference(q, k, v, params, n_head=n_head)
    assert out.shape == (B, T, d_model)
    assert attn.shape == (B, T, n_head, T)
    assert jnp.max(jnp.abs(out - ref_out)) < TOL
    assert jnp.max(jnp.abs(attn - ref_attn)) < TOL

    # Masked (causal) path: masked_fill(mask, -1e9) inside the kernel.
    rows = jnp.arange(T)[:, None]
    cols = jnp.arange(T)[None, :]
    mask = jnp.broadcast_to(cols > rows, (B, T, T))
    out_m, attn_m = interpretable_mha(q, k, v, params, n_head=n_head, mask=mask)
    out_m, attn_m = jax.block_until_ready((out_m, attn_m))
    ref_out_m, ref_attn_m = _reference(q, k, v, params, n_head=n_head, mask=mask)
    assert jnp.max(jnp.abs(out_m - ref_out_m)) < TOL
    assert jnp.max(jnp.abs(attn_m - ref_attn_m)) < TOL

    print("KERNEL_OK")
</pallas_src>

<mosaic_0001>
module attributes {stable_mosaic.version = 11 : i64} {
  func.func @kernel(%arg0: i32, %arg1: i32, %arg2: memref<1x8x32xf32, #tpu.memory_space<vmem>>, %arg3: memref<1x8x32xf32, #tpu.memory_space<vmem>>, %arg4: memref<1x8x32xf32, #tpu.memory_space<vmem>>, %arg5: memref<32x32xf32, #tpu.memory_space<vmem>>, %arg6: memref<1x32xf32, #tpu.memory_space<vmem>>, %arg7: memref<32x32xf32, #tpu.memory_space<vmem>>, %arg8: memref<1x32xf32, #tpu.memory_space<vmem>>, %arg9: memref<32x8xf32, #tpu.memory_space<vmem>>, %arg10: memref<1x8xf32, #tpu.memory_space<vmem>>, %arg11: memref<8x32xf32, #tpu.memory_space<vmem>>, %arg12: memref<1x8x32xf32, #tpu.memory_space<vmem>>, %arg13: memref<1x8x4x8xf32, #tpu.memory_space<vmem>>) attributes {dimension_semantics = [#tpu.dimension_semantics<parallel>, #tpu.dimension_semantics<parallel>], iteration_bounds = array<i64: 2, 1>, scalar_prefetch = 0 : i64, scratch_operands = 0 : i64, tpu.core_type = #tpu.core_type<tc>, window_params = [{transform_indices = @transform_0, window_bounds = array<i64: 1, 8, 32>}, {transform_indices = @transform_1, window_bounds = array<i64: 1, 8, 32>}, {transform_indices = @transform_2, window_bounds = array<i64: 1, 8, 32>}, {pipeline_mode = #tpu.pipeline_mode<synchronous>, transform_indices = @transform_3, window_bounds = array<i64: 32, 32>}, {pipeline_mode = #tpu.pipeline_mode<synchronous>, transform_indices = @transform_4, window_bounds = array<i64: 1, 32>}, {pipeline_mode = #tpu.pipeline_mode<synchronous>, transform_indices = @transform_5, window_bounds = array<i64: 32, 32>}, {pipeline_mode = #tpu.pipeline_mode<synchronous>, transform_indices = @transform_6, window_bounds = array<i64: 1, 32>}, {pipeline_mode = #tpu.pipeline_mode<synchronous>, transform_indices = @transform_7, window_bounds = array<i64: 32, 8>}, {pipeline_mode = #tpu.pipeline_mode<synchronous>, transform_indices = @transform_8, window_bounds = array<i64: 1, 8>}, {pipeline_mode = #tpu.pipeline_mode<synchronous>, transform_indices = @transform_9, window_bounds = array<i64: 8, 32>}, {transform_indices = @transform_10, window_bounds = array<i64: 1, 8, 32>}, {transform_indices = @transform_11, window_bounds = array<i64: 1, 8, 4, 8>}]} {
    %c0 = arith.constant 0 : index
    %c0_0 = arith.constant 0 : index
    %c0_1 = arith.constant 0 : index
    %0 = vector.load %arg2[%c0, %c0_0, %c0_1] : memref<1x8x32xf32, #tpu.memory_space<vmem>>, vector<1x8x32xf32>
    %1 = vector.shape_cast %0 : vector<1x8x32xf32> to vector<8x32xf32>
    %c0_2 = arith.constant 0 : index
    %c0_3 = arith.constant 0 : index
    %c0_4 = arith.constant 0 : index
    %2 = vector.load %arg3[%c0_2, %c0_3, %c0_4] : memref<1x8x32xf32, #tpu.memory_space<vmem>>, vector<1x8x32xf32>
    %3 = vector.shape_cast %2 : vector<1x8x32xf32> to vector<8x32xf32>
    %c0_5 = arith.constant 0 : index
    %c0_6 = arith.constant 0 : index
    %c0_7 = arith.constant 0 : index
    %4 = vector.load %arg4[%c0_5, %c0_6, %c0_7] : memref<1x8x32xf32, #tpu.memory_space<vmem>>, vector<1x8x32xf32>
    %5 = vector.shape_cast %4 : vector<1x8x32xf32> to vector<8x32xf32>
    %c0_8 = arith.constant 0 : index
    %c0_9 = arith.constant 0 : index
    %6 = vector.load %arg5[%c0_8, %c0_9] : memref<32x32xf32, #tpu.memory_space<vmem>>, vector<32x32xf32>
    %cst = arith.constant dense<0.000000e+00> : vector<8x32xf32>
    %7 = tpu.matmul %1, %6, %cst {dimension_numbers = #tpu.dot_dimension_numbers<[1], [0], [0], [1], [0, 0, 1, 1], [], []>} : vector<8x32xf32>, vector<32x32xf32>, vector<8x32xf32> -> vector<8x32xf32>
    %c0_10 = arith.constant 0 : index
    %c0_11 = arith.constant 0 : index
    %8 = vector.load %arg6[%c0_10, %c0_11] : memref<1x32xf32, #tpu.memory_space<vmem>>, vector<1x32xf32>
    %9 = vector.broadcast %8 : vector<1x32xf32> to vector<8x32xf32>
    %10 = arith.addf %7, %9 : vector<8x32xf32>
    %c0_12 = arith.constant 0 : index
    %c0_13 = arith.constant 0 : index
    %11 = vector.load %arg7[%c0_12, %c0_13] : memref<32x32xf32, #tpu.memory_space<vmem>>, vector<32x32xf32>
    %cst_14 = arith.constant dense<0.000000e+00> : vector<8x32xf32>
    %12 = tpu.matmul %3, %11, %cst_14 {dimension_numbers = #tpu.dot_dimension_numbers<[1], [0], [0], [1], [0, 0, 1, 1], [], []>} : vector<8x32xf32>, vector<32x32xf32>, vector<8x32xf32> -> vector<8x32xf32>
    %c0_15 = arith.constant 0 : index
    %c0_16 = arith.constant 0 : index
    %13 = vector.load %arg8[%c0_15, %c0_16] : memref<1x32xf32, #tpu.memory_space<vmem>>, vector<1x32xf32>
    %14 = vector.broadcast %13 : vector<1x32xf32> to vector<8x32xf32>
    %15 = arith.addf %12, %14 : vector<8x32xf32>
    %c0_17 = arith.constant 0 : index
    %c0_18 = arith.constant 0 : index
    %16 = vector.load %arg9[%c0_17, %c0_18] : memref<32x8xf32, #tpu.memory_space<vmem>>, vector<32x8xf32>
    %cst_19 = arith.constant dense<0.000000e+00> : vector<8x8xf32>
    %17 = tpu.matmul %5, %16, %cst_19 {dimension_numbers = #tpu.dot_dimension_numbers<[1], [0], [0], [1], [0, 0, 1, 1], [], []>} : vector<8x32xf32>, vector<32x8xf32>, vector<8x8xf32> -> vector<8x8xf32>
    %c0_20 = arith.constant 0 : index
    %c0_21 = arith.constant 0 : index
    %18 = vector.load %arg10[%c0_20, %c0_21] : memref<1x8xf32, #tpu.memory_space<vmem>>, vector<1x8xf32>
    %19 = vector.broadcast %18 : vector<1x8xf32> to vector<8x8xf32>
    %20 = arith.addf %17, %19 : vector<8x8xf32>
    %21 = vector.extract_strided_slice %10 {offsets = [0, 0], sizes = [8, 8], strides = [1, 1]} : vector<8x32xf32> to vector<8x8xf32>
    %22 = vector.extract_strided_slice %15 {offsets = [0, 0], sizes = [8, 8], strides = [1, 1]} : vector<8x32xf32> to vector<8x8xf32>
    %cst_22 = arith.constant dense<0.000000e+00> : vector<8x8xf32>
    %23 = tpu.matmul %21, %22, %cst_22 {dimension_numbers = #tpu.dot_dimension_numbers<[1], [1], [0], [0], [0, 0, 1, 0], [], []>} : vector<8x8xf32>, vector<8x8xf32>, vector<8x8xf32> -> vector<8x8xf32>
    %cst_23 = arith.constant 0.353553385 : f32
    %24 = vector.broadcast %cst_23 : f32 to vector<8x8xf32>
    %25 = arith.mulf %23, %24 : vector<8x8xf32>
    %cst_24 = arith.constant dense<0xFF800000> : vector<8xf32>
    %26 = vector.multi_reduction <maximumf>, %25, %cst_24 [1] : vector<8x8xf32> to vector<8xf32>
    %27 = vector.shape_cast %26 : vector<8xf32> to vector<8x1xf32>
    %28 = vector.broadcast %27 : vector<8x1xf32> to vector<8x8xf32>
    %29 = arith.subf %25, %28 : vector<8x8xf32>
    %30 = math.exp %29 : vector<8x8xf32>
    %cst_25 = arith.constant dense<0.000000e+00> : vector<8xf32>
    %31 = vector.multi_reduction <add>, %30, %cst_25 [1] : vector<8x8xf32> to vector<8xf32>
    %32 = vector.shape_cast %31 : vector<8xf32> to vector<8x1xf32>
    %33 = tpu.reciprocal %32 {approx = true} : vector<8x1xf32> -> vector<8x1xf32>
    %34 = vector.broadcast %33 : vector<8x1xf32> to vector<8x8xf32>
    %35 = arith.mulf %30, %34 : vector<8x8xf32>
    %36 = vector.extract_strided_slice %10 {offsets = [0, 8], sizes = [8, 8], strides = [1, 1]} : vector<8x32xf32> to vector<8x8xf32>
    %37 = vector.extract_strided_slice %15 {offsets = [0, 8], sizes = [8, 8], strides = [1, 1]} : vector<8x32xf32> to vector<8x8xf32>
    %cst_26 = arith.constant dense<0.000000e+00> : vector<8x8xf32>
    %38 = tpu.matmul %36, %37, %cst_26 {dimension_numbers = #tpu.dot_dimension_numbers<[1], [1], [0], [0], [0, 0, 1, 0], [], []>} : vector<8x8xf32>, vector<8x8xf32>, vector<8x8xf32> -> vector<8x8xf32>
    %cst_27 = arith.constant 0.353553385 : f32
    %39 = vector.broadcast %cst_27 : f32 to vector<8x8xf32>
    %40 = arith.mulf %38, %39 : vector<8x8xf32>
    %cst_28 = arith.constant dense<0xFF800000> : vector<8xf32>
    %41 = vector.multi_reduction <maximumf>, %40, %cst_28 [1] : vector<8x8xf32> to vector<8xf32>
    %42 = vector.shape_cast %41 : vector<8xf32> to vector<8x1xf32>
    %43 = vector.broadcast %42 : vector<8x1xf32> to vector<8x8xf32>
    %44 = arith.subf %40, %43 : vector<8x8xf32>
    %45 = math.exp %44 : vector<8x8xf32>
    %cst_29 = arith.constant dense<0.000000e+00> : vector<8xf32>
    %46 = vector.multi_reduction <add>, %45, %cst_29 [1] : vector<8x8xf32> to vector<8xf32>
    %47 = vector.shape_cast %46 : vector<8xf32> to vector<8x1xf32>
    %48 = tpu.reciprocal %47 {approx = true} : vector<8x1xf32> -> vector<8x1xf32>
    %49 = vector.broadcast %48 : vector<8x1xf32> to vector<8x8xf32>
    %50 = arith.mulf %45, %49 : vector<8x8xf32>
    %51 = arith.addf %35, %50 : vector<8x8xf32>
    %52 = vector.extract_strided_slice %10 {offsets = [0, 16], sizes = [8, 8], strides = [1, 1]} : vector<8x32xf32> to vector<8x8xf32>
    %53 = vector.extract_strided_slice %15 {offsets = [0, 16], sizes = [8, 8], strides = [1, 1]} : vector<8x32xf32> to vector<8x8xf32>
    %cst_30 = arith.constant dense<0.000000e+00> : vector<8x8xf32>
    %54 = tpu.matmul %52, %53, %cst_30 {dimension_numbers = #tpu.dot_dimension_numbers<[1], [1], [0], [0], [0, 0, 1, 0], [], []>} : vector<8x8xf32>, vector<8x8xf32>, vector<8x8xf32> -> vector<8x8xf32>
    %cst_31 = arith.constant 0.353553385 : f32
    %55 = vector.broadcast %cst_31 : f32 to vector<8x8xf32>
    %56 = arith.mulf %54, %55 : vector<8x8xf32>
    %cst_32 = arith.constant dense<0xFF800000> : vector<8xf32>
    %57 = vector.multi_reduction <maximumf>, %56, %cst_32 [1] : vector<8x8xf32> to vector<8xf32>
    %58 = vector.shape_cast %57 : vector<8xf32> to vector<8x1xf32>
    %59 = vector.broadcast %58 : vector<8x1xf32> to vector<8x8xf32>
    %60 = arith.subf %56, %59 : vector<8x8xf32>
    %61 = math.exp %60 : vector<8x8xf32>
    %cst_33 = arith.constant dense<0.000000e+00> : vector<8xf32>
    %62 = vector.multi_reduction <add>, %61, %cst_33 [1] : vector<8x8xf32> to vector<8xf32>
    %63 = vector.shape_cast %62 : vector<8xf32> to vector<8x1xf32>
    %64 = tpu.reciprocal %63 {approx = true} : vector<8x1xf32> -> vector<8x1xf32>
    %65 = vector.broadcast %64 : vector<8x1xf32> to vector<8x8xf32>
    %66 = arith.mulf %61, %65 : vector<8x8xf32>
    %67 = arith.addf %51, %66 : vector<8x8xf32>
    %68 = vector.extract_strided_slice %10 {offsets = [0, 24], sizes = [8, 8], strides = [1, 1]} : vector<8x32xf32> to vector<8x8xf32>
    %69 = vector.extract_strided_slice %15 {offsets = [0, 24], sizes = [8, 8], strides = [1, 1]} : vector<8x32xf32> to vector<8x8xf32>
    %cst_34 = arith.constant dense<0.000000e+00> : vector<8x8xf32>
    %70 = tpu.matmul %68, %69, %cst_34 {dimension_numbers = #tpu.dot_dimension_numbers<[1], [1], [0], [0], [0, 0, 1, 0], [], []>} : vector<8x8xf32>, vector<8x8xf32>, vector<8x8xf32> -> vector<8x8xf32>
    %cst_35 = arith.constant 0.353553385 : f32
    %71 = vector.broadcast %cst_35 : f32 to vector<8x8xf32>
    %72 = arith.mulf %70, %71 : vector<8x8xf32>
    %cst_36 = arith.constant dense<0xFF800000> : vector<8xf32>
    %73 = vector.multi_reduction <maximumf>, %72, %cst_36 [1] : vector<8x8xf32> to vector<8xf32>
    %74 = vector.shape_cast %73 : vector<8xf32> to vector<8x1xf32>
    %75 = vector.broadcast %74 : vector<8x1xf32> to vector<8x8xf32>
    %76 = arith.subf %72, %75 : vector<8x8xf32>
    %77 = math.exp %76 : vector<8x8xf32>
    %cst_37 = arith.constant dense<0.000000e+00> : vector<8xf32>
    %78 = vector.multi_reduction <add>, %77, %cst_37 [1] : vector<8x8xf32> to vector<8xf32>
    %79 = vector.shape_cast %78 : vector<8xf32> to vector<8x1xf32>
    %80 = tpu.reciprocal %79 {approx = true} : vector<8x1xf32> -> vector<8x1xf32>
    %81 = vector.broadcast %80 : vector<8x1xf32> to vector<8x8xf32>
    %82 = arith.mulf %77, %81 : vector<8x8xf32>
    %83 = arith.addf %67, %82 : vector<8x8xf32>
    %84 = vector.shape_cast %35 : vector<8x8xf32> to vector<8x1x8xf32>
    %85 = vector.shape_cast %50 : vector<8x8xf32> to vector<8x1x8xf32>
    %86 = vector.shape_cast %66 : vector<8x8xf32> to vector<8x1x8xf32>
    %87 = vector.shape_cast %82 : vector<8x8xf32> to vector<8x1x8xf32>
    %88 = tpu.concatenate %84, %85, %86, %87 in 1 : vector<8x1x8xf32>, vector<8x1x8xf32>, vector<8x1x8xf32>, vector<8x1x8xf32> -> vector<8x4x8xf32>
    %c0_38 = arith.constant 0 : index
    %c0_39 = arith.constant 0 : index
    %c0_40 = arith.constant 0 : index
    %c0_41 = arith.constant 0 : index
    %89 = vector.load %arg13[%c0_38, %c0_39, %c0_40, %c0_41] : memref<1x8x4x8xf32, #tpu.memory_space<vmem>>, vector<1x8x4x8xf32>
    %90 = vector.shape_cast %89 : vector<1x8x4x8xf32> to vector<8x4x8xf32>
    %91 = vector.shape_cast %88 : vector<8x4x8xf32> to vector<1x8x4x8xf32>
    tpu.vector_store %arg13[%c0_38, %c0_39, %c0_40, %c0_41], %91 {strides = array<i32>} : memref<1x8x4x8xf32, #tpu.memory_space<vmem>>, vector<1x8x4x8xf32>,
    %cst_42 = arith.constant 2.500000e-01 : f32
    %92 = vector.broadcast %cst_42 : f32 to vector<8x8xf32>
    %93 = arith.mulf %83, %92 : vector<8x8xf32>
    %cst_43 = arith.constant dense<0.000000e+00> : vector<8x8xf32>
    %94 = tpu.matmul %93, %20, %cst_43 {dimension_numbers = #tpu.dot_dimension_numbers<[1], [0], [0], [1], [0, 0, 1, 1], [], []>} : vector<8x8xf32>, vector<8x8xf32>, vector<8x8xf32> -> vector<8x8xf32>
    %c0_44 = arith.constant 0 : index
    %c0_45 = arith.constant 0 : index
    %95 = vector.load %arg11[%c0_44, %c0_45] : memref<8x32xf32, #tpu.memory_space<vmem>>, vector<8x32xf32>
    %cst_46 = arith.constant dense<0.000000e+00> : vector<8x32xf32>
    %96 = tpu.matmul %94, %95, %cst_46 {dimension_numbers = #tpu.dot_dimension_numbers<[1], [0], [0], [1], [0, 0, 1, 1], [], []>} : vector<8x8xf32>, vector<8x32xf32>, vector<8x32xf32> -> vector<8x32xf32>
    %c0_47 = arith.constant 0 : index
    %c0_48 = arith.constant 0 : index
    %c0_49 = arith.constant 0 : index
    %97 = vector.load %arg12[%c0_47, %c0_48, %c0_49] : memref<1x8x32xf32, #tpu.memory_space<vmem>>, vector<1x8x32xf32>
    %98 = vector.shape_cast %97 : vector<1x8x32xf32> to vector<8x32xf32>
    %99 = vector.shape_cast %96 : vector<8x32xf32> to vector<1x8x32xf32>
    tpu.vector_store %arg12[%c0_47, %c0_48, %c0_49], %99 {strides = array<i32>} : memref<1x8x32xf32, #tpu.memory_space<vmem>>, vector<1x8x32xf32>,
    return
  }
  func.func @transform_0(%arg0: i32, %arg1: i32) -> (i32, i32, i32) {
    %c0_i32 = arith.constant 0 : i32
    %c0_i32_0 = arith.constant 0 : i32
    return %arg0, %arg1, %c0_i32 : i32, i32, i32
  }
  func.func @transform_1(%arg0: i32, %arg1: i32) -> (i32, i32, i32) {
    %c0_i32 = arith.constant 0 : i32
    %c0_i32_0 = arith.constant 0 : i32
    %c0_i32_1 = arith.constant 0 : i32
    return %arg0, %c0_i32, %c0_i32_0 : i32, i32, i32
  }
  func.func @transform_2(%arg0: i32, %arg1: i32) -> (i32, i32, i32) {
    %c0_i32 = arith.constant 0 : i32
    %c0_i32_0 = arith.constant 0 : i32
    %c0_i32_1 = arith.constant 0 : i32
    return %arg0, %c0_i32, %c0_i32_0 : i32, i32, i32
  }
  func.func @transform_3(%arg0: i32, %arg1: i32) -> (i32, i32) {
    %c0_i32 = arith.constant 0 : i32
    %c0_i32_0 = arith.constant 0 : i32
    %c0_i32_1 = arith.constant 0 : i32
    return %c0_i32, %c0_i32_0 : i32, i32
  }
  func.func @transform_4(%arg0: i32, %arg1: i32) -> (i32, i32) {
    %c0_i32 = arith.constant 0 : i32
    %c0_i32_0 = arith.constant 0 : i32
    %c0_i32_1 = arith.constant 0 : i32
    return %c0_i32, %c0_i32_0 : i32, i32
  }
  func.func @transform_5(%arg0: i32, %arg1: i32) -> (i32, i32) {
    %c0_i32 = arith.constant 0 : i32
    %c0_i32_0 = arith.constant 0 : i32
    %c0_i32_1 = arith.constant 0 : i32
    return %c0_i32, %c0_i32_0 : i32, i32
  }
  func.func @transform_6(%arg0: i32, %arg1: i32) -> (i32, i32) {
    %c0_i32 = arith.constant 0 : i32
    %c0_i32_0 = arith.constant 0 : i32
    %c0_i32_1 = arith.constant 0 : i32
    return %c0_i32, %c0_i32_0 : i32, i32
  }
  func.func @transform_7(%arg0: i32, %arg1: i32) -> (i32, i32) {
    %c0_i32 = arith.constant 0 : i32
    %c0_i32_0 = arith.constant 0 : i32
    %c0_i32_1 = arith.constant 0 : i32
    return %c0_i32, %c0_i32_0 : i32, i32
  }
  func.func @transform_8(%arg0: i32, %arg1: i32) -> (i32, i32) {
    %c0_i32 = arith.constant 0 : i32
    %c0_i32_0 = arith.constant 0 : i32
    %c0_i32_1 = arith.constant 0 : i32
    return %c0_i32, %c0_i32_0 : i32, i32
  }
  func.func @transform_9(%arg0: i32, %arg1: i32) -> (i32, i32) {
    %c0_i32 = arith.constant 0 : i32
    %c0_i32_0 = arith.constant 0 : i32
    %c0_i32_1 = arith.constant 0 : i32
    return %c0_i32, %c0_i32_0 : i32, i32
  }
  func.func @transform_10(%arg0: i32, %arg1: i32) -> (i32, i32, i32) {
    %c0_i32 = arith.constant 0 : i32
    %c0_i32_0 = arith.constant 0 : i32
    return %arg0, %arg1, %c0_i32 : i32, i32, i32
  }
  func.func @transform_11(%arg0: i32, %arg1: i32) -> (i32, i32, i32, i32) {
    %c0_i32 = arith.constant 0 : i32
    %c0_i32_0 = arith.constant 0 : i32
    %c0_i32_1 = arith.constant 0 : i32
    return %arg0, %arg1, %c0_i32, %c0_i32_0 : i32, i32, i32, i32
  }
}

</mosaic_0001>

<llo_original>
// kernel: tpu_custom_call.1
$region0: #{tpu_custom_call.1}
  #allocation0 [shape = 'u32[]', space=smem, size = 0x4, offset = 0x4, fixed_abs, tag = 'smem constant byte address 0x4 - core index']
  #allocation1 [shape = 'u32[144,128]{1,0:T(1,128)}', space=vmem, size = 0x12000, scoped, tag = 'internal scratch']
  %s0 = inlined_call_operand.vmem [shape: f32[2,8,32], index: 0, kind: input, shape index: {}]
  %s1 = inlined_call_operand.hbm [shape: f32[2,8,32], index: 1, kind: input, shape index: {}]
  %s2 = inlined_call_operand.hbm [shape: f32[2,8,32], index: 2, kind: input, shape index: {}]
  %s3 = inlined_call_operand.vmem [shape: f32[32,32], index: 3, kind: input, shape index: {}]
  %s4 = inlined_call_operand.vmem [shape: f32[1,32], index: 4, kind: input, shape index: {}]
  %s5 = inlined_call_operand.hbm [shape: f32[32,32], index: 5, kind: input, shape index: {}]
  %s6 = inlined_call_operand.vmem [shape: f32[1,32], index: 6, kind: input, shape index: {}]
  %s7 = inlined_call_operand.vmem [shape: f32[32,8], index: 7, kind: input, shape index: {}]
  %s8 = inlined_call_operand.vmem [shape: f32[1,8], index: 8, kind: input, shape index: {}]
  %s9 = inlined_call_operand.vmem [shape: f32[8,32], index: 9, kind: input, shape index: {}]
  %s10 = inlined_call_operand.hbm [shape: f32[2,8,32], index: 10, kind: output, shape index: {0}]
  %s11 = inlined_call_operand.hbm [shape: f32[2,8,4,8], index: 11, kind: output, shape index: {1}]
  %12 = xla_tuple %s10, %s11
  %s13 = sld [smem:[#allocation0]]
  $region93: #{tpu_custom_call.1} parent=0
    _
  %s15 = ssub.s32 1, %s13
  %s16 = scalar_select 0, %s15, %s13
  $region1: #{tpu_custom_call.1} parent=0
    #allocation2 [shape = 'u8[8192]{0}', space=vmem, size = 0x2000, scoped, tag = 'input window, operand 1']
    #allocation3 [shape = 's32[2]{0}', space=sflag, size = 0x8, scoped, tag = 'scoped memory for tpu_custom_call.1']
    #allocation4 [shape = 's32[2]{0}', space=sflag, size = 0x8, scoped, tag = 'scoped memory for tpu_custom_call.1']
    #allocation5 [shape = 'u8[8192]{0}', space=vmem, size = 0x2000, scoped, tag = 'input window, operand 2']
    #allocation6 [shape = 's32[2]{0}', space=sflag, size = 0x8, scoped, tag = 'scoped memory for tpu_custom_call.1']
    #allocation7 [shape = 'u8[16384]{0}', space=vmem, size = 0x4000, scoped, tag = 'input window, operand 5, single buffered']
    #allocation8 [shape = 'u8[8192]{0}', space=vmem, size = 0x2000, scoped, tag = 'output window, operand 0']
    #allocation9 [shape = 'u8[32768]{0}', space=vmem, size = 0x8000, scoped, tag = 'output window, operand 1']
    #allocation10 [shape = 's32[2]{0}', space=sflag, size = 0x8, scoped, tag = 'scoped memory for tpu_custom_call.1']
    %17 = vsyncpa [#allocation3], 0
    %s18 = scalar_lea.sflag [#allocation3], 1
    %19 = vsyncpa %s18, 0
    %20 = vsyncpa [#allocation6], 0
    %s21 = scalar_lea.sflag [#allocation6], 1
    %22 = vsyncpa %s21, 0
    %23 = vsyncpa [#allocation4], 0
    %s24 = scalar_lea.sflag [#allocation4], 1
    %25 = vsyncpa %s24, 0
    %26 = vsyncpa [#allocation10], 0
    %s27 = scalar_lea.sflag [#allocation10], 1
    %28 = vsyncpa %s27, 0
    loop: start=0, step=1, limit=4
    $region2: #{tpu_custom_call.1} parent=1 // loop_pre_header
      _
    $region3: #{tpu_custom_call.1} parent=1 // loop_header
      %s30 = sphi 0, %s34
      %p31 = scmp.ge.s32.totalorder %s30, 4
      %s37 = sphi 0, %s49
      %s38 = sphi 0, %s45
      %s39 = sphi 0, %s37
      %s40 = sphi 0, %s38
      %s41 = sphi 0, %s39
      %s42 = sphi 0, %s40
      %s54 = sphi 0, %s56
      %s57 = sphi 0, %s54
      %s58 = sphi 0, %s57
      %s74 = sphi 0, %s58
      %s80 = sphi 0, %s82
      %s83 = sphi 0, %s80
      %s84 = sphi 0, %s83
      %s100 = sphi 0, %s84
      %s106 = sphi 0, %s108
      %s109 = sphi 0, %s106
      %s110 = sphi 0, %s109
      %s126 = sphi 0, %s110
      %s130 = sphi 0, %s130
      %s132 = sphi 0, %s130
      %s133 = sphi 0, %s132
      %s147 = sphi 0, %s133
      %s151 = sphi 0, %s151
      %s153 = sphi 0, %s151
      %s154 = sphi 0, %s153
      %s168 = sphi 0, %s154
      %s172 = sphi 0, %s172
      %s174 = sphi 0, %s172
      %s175 = sphi 0, %s174
      %s189 = sphi 0, %s175
      %s193 = sphi 0, %s193
      %s195 = sphi 0, %s193
      %s196 = sphi 0, %s195
      %s210 = sphi 0, %s196
      %s214 = sphi 0, %s214
      %s216 = sphi 0, %s214
      %s217 = sphi 0, %s216
      %s231 = sphi 0, %s217
      %s235 = sphi 0, %s235
      %s237 = sphi 0, %s235
      %s238 = sphi 0, %s237
      %s252 = sphi 0, %s238
      %s256 = sphi 0, %s256
      %s258 = sphi 0, %s256
      %s259 = sphi 0, %s258
      %s273 = sphi 0, %s259
      %s281 = sphi 0, %s283
      %s284 = sphi 0, %s281
      %s285 = sphi 0, %s284
      %s301 = sphi 0, %s285
      %s309 = sphi 0, %s311
      %s312 = sphi 0, %s309
      %s313 = sphi 0, %s312
      %s329 = sphi 0, %s313
    $region4: #{tpu_custom_call.1} parent=1 // loop_header_branch
      %33 = sbr.rel (%p31) target = $region8
    $region5: #{tpu_custom_call.1} parent=1 // loop_body
      %s35 = ssub.s32 %s30, 1
      %s36 = ssub.s32 %s30, 2
      %s43 = sadd.s32 1, %s38
      %p44 = scmp.ge.s32.totalorder %s43, 1
      %s45 = scalar_select %p44, 0, %s43
      %s46 = sadd.s32 1, %s37
      %s47 = scalar_select %p44, %s46, %s37
      %p48 = scmp.ge.s32.totalorder %s47, 2
      %s49 = scalar_select %p48, 0, %s47
      %s50 = ssub.s32 %s37, %s49
      %s51 = ssub.s32 %s38, %s45
      %s52 = sor.u32 %s50, %s51
      %p53 = scmp.eq.s32.totalorder %s52, 0
      %s55 = sadd.s32 %s54, 1
      %s56 = scalar_select %p53, %s54, %s55
      %p59 = pneg %p53
      %p60 = scmp.eq.s32.totalorder %s30, 1
      %p61 = por %p59, %p60
      %p62 = scmp.ne.s32.totalorder %s54, %s57
      %p63 = scmp.eq.s32.totalorder %s30, 0
      %p64 = por %p62, %p63
      %p65 = scmp.ne.s32.totalorder %s54, %s57
      %p66 = scmp.eq.s32.totalorder %s35, 1
      %p67 = por %p65, %p66
      %p68 = scmp.ne.s32.totalorder %s57, %s58
      %p69 = scmp.eq.s32.totalorder %s35, 0
      %p70 = por %p68, %p69
      %p71 = scmp.ne.s32.totalorder %s57, %s58
      %p72 = scmp.eq.s32.totalorder %s36, 1
      %p73 = por %p71, %p72
      %p75 = scmp.ne.s32.totalorder %s58, %s74
      %p76 = scmp.eq.s32.totalorder %s36, 0
      %p77 = por %p75, %p76
      %s78 = ssub.s32 %s37, %s49
      %p79 = scmp.eq.s32.totalorder %s78, 0
      %s81 = sadd.s32 %s80, 1
      %s82 = scalar_select %p79, %s80, %s81
      %p85 = pneg %p79
      %p86 = scmp.eq.s32.totalorder %s30, 1
      %p87 = por %p85, %p86
      %p88 = scmp.ne.s32.totalorder %s80, %s83
      %p89 = scmp.eq.s32.totalorder %s30, 0
      %p90 = por %p88, %p89
      %p91 = scmp.ne.s32.totalorder %s80, %s83
      %p92 = scmp.eq.s32.totalorder %s35, 1
      %p93 = por %p91, %p92
      %p94 = scmp.ne.s32.totalorder %s83, %s84
      %p95 = scmp.eq.s32.totalorder %s35, 0
      %p96 = por %p94, %p95
      %p97 = scmp.ne.s32.totalorder %s83, %s84
      %p98 = scmp.eq.s32.totalorder %s36, 1
      %p99 = por %p97, %p98
      %p101 = scmp.ne.s32.totalorder %s84, %s100
      %p102 = scmp.eq.s32.totalorder %s36, 0
      %p103 = por %p101, %p102
      %s104 = ssub.s32 %s37, %s49
      %p105 = scmp.eq.s32.totalorder %s104, 0
      %s107 = sadd.s32 %s106, 1
      %s108 = scalar_select %p105, %s106, %s107
      %p111 = pneg %p105
      %p112 = scmp.eq.s32.totalorder %s30, 1
      %p113 = por %p111, %p112
      %p114 = scmp.ne.s32.totalorder %s106, %s109
      %p115 = scmp.eq.s32.totalorder %s30, 0
      %p116 = por %p114, %p115
      %p117 = scmp.ne.s32.totalorder %s106, %s109
      %p118 = scmp.eq.s32.totalorder %s35, 1
      %p119 = por %p117, %p118
      %p120 = scmp.ne.s32.totalorder %s109, %s110
      %p121 = scmp.eq.s32.totalorder %s35, 0
      %p122 = por %p120, %p121
      %p123 = scmp.ne.s32.totalorder %s109, %s110
      %p124 = scmp.eq.s32.totalorder %s36, 1
      %p125 = por %p123, %p124
      %p127 = scmp.ne.s32.totalorder %s110, %s126
      %p128 = scmp.eq.s32.totalorder %s36, 0
      %p129 = por %p127, %p128
      %s131 = sadd.s32 %s130, 1
      %p134 = scmp.eq.s32.totalorder %s30, 1
      %p135 = scmp.ne.s32.totalorder %s130, %s132
      %p136 = scmp.eq.s32.totalorder %s30, 0
      %p137 = por %p135, %p136
      %p138 = scmp.ne.s32.totalorder %s130, %s132
      %p139 = scmp.eq.s32.totalorder %s35, 1
      %p140 = por %p138, %p139
      %p141 = scmp.ne.s32.totalorder %s132, %s133
      %p142 = scmp.eq.s32.totalorder %s35, 0
      %p143 = por %p141, %p142
      %p144 = scmp.ne.s32.totalorder %s132, %s133
      %p145 = scmp.eq.s32.totalorder %s36, 1
      %p146 = por %p144, %p145
      %p148 = scmp.ne.s32.totalorder %s133, %s147
      %p149 = scmp.eq.s32.totalorder %s36, 0
      %p150 = por %p148, %p149
      %s152 = sadd.s32 %s151, 1
      %p155 = scmp.eq.s32.totalorder %s30, 1
      %p156 = scmp.ne.s32.totalorder %s151, %s153
      %p157 = scmp.eq.s32.totalorder %s30, 0
      %p158 = por %p156, %p157
      %p159 = scmp.ne.s32.totalorder %s151, %s153
      %p160 = scmp.eq.s32.totalorder %s35, 1
      %p161 = por %p159, %p160
      %p162 = scmp.ne.s32.totalorder %s153, %s154
      %p163 = scmp.eq.s32.totalorder %s35, 0
      %p164 = por %p162, %p163
      %p165 = scmp.ne.s32.totalorder %s153, %s154
      %p166 = scmp.eq.s32.totalorder %s36, 1
      %p167 = por %p165, %p166
      %p169 = scmp.ne.s32.totalorder %s154, %s168
      %p170 = scmp.eq.s32.totalorder %s36, 0
      %p171 = por %p169, %p170
      %s173 = sadd.s32 %s172, 1
      %p176 = scmp.eq.s32.totalorder %s30, 1
      %p177 = scmp.ne.s32.totalorder %s172, %s174
      %p178 = scmp.eq.s32.totalorder %s30, 0
      %p179 = por %p177, %p178
      %p180 = scmp.ne.s32.totalorder %s172, %s174
      %p181 = scmp.eq.s32.totalorder %s35, 1
      %p182 = por %p180, %p181
      %p183 = scmp.ne.s32.totalorder %s174, %s175
      %p184 = scmp.eq.s32.totalorder %s35, 0
      %p185 = por %p183, %p184
      %p186 = scmp.ne.s32.totalorder %s174, %s175
      %p187 = scmp.eq.s32.totalorder %s36, 1
      %p188 = por %p186, %p187
      %p190 = scmp.ne.s32.totalorder %s175, %s189
      %p191 = scmp.eq.s32.totalorder %s36, 0
      %p192 = por %p190, %p191
      %s194 = sadd.s32 %s193, 1
      %p197 = scmp.eq.s32.totalorder %s30, 1
      %p198 = scmp.ne.s32.totalorder %s193, %s195
      %p199 = scmp.eq.s32.totalorder %s30, 0
      %p200 = por %p198, %p199
      %p201 = scmp.ne.s32.totalorder %s193, %s195
      %p202 = scmp.eq.s32.totalorder %s35, 1
      %p203 = por %p201, %p202
      %p204 = scmp.ne.s32.totalorder %s195, %s196
      %p205 = scmp.eq.s32.totalorder %s35, 0
      %p206 = por %p204, %p205
      %p207 = scmp.ne.s32.totalorder %s195, %s196
      %p208 = scmp.eq.s32.totalorder %s36, 1
      %p209 = por %p207, %p208
      %p211 = scmp.ne.s32.totalorder %s196, %s210
      %p212 = scmp.eq.s32.totalorder %s36, 0
      %p213 = por %p211, %p212
      %s215 = sadd.s32 %s214, 1
      %p218 = scmp.eq.s32.totalorder %s30, 1
      %p219 = scmp.ne.s32.totalorder %s214, %s216
      %p220 = scmp.eq.s32.totalorder %s30, 0
      %p221 = por %p219, %p220
      %p222 = scmp.ne.s32.totalorder %s214, %s216
      %p223 = scmp.eq.s32.totalorder %s35, 1
      %p224 = por %p222, %p223
      %p225 = scmp.ne.s32.totalorder %s216, %s217
      %p226 = scmp.eq.s32.totalorder %s35, 0
      %p227 = por %p225, %p226
      %p228 = scmp.ne.s32.totalorder %s216, %s217
      %p229 = scmp.eq.s32.totalorder %s36, 1
      %p230 = por %p228, %p229
      %p232 = scmp.ne.s32.totalorder %s217, %s231
      %p233 = scmp.eq.s32.totalorder %s36, 0
      %p234 = por %p232, %p233
      %s236 = sadd.s32 %s235, 1
      %p239 = scmp.eq.s32.totalorder %s30, 1
      %p240 = scmp.ne.s32.totalorder %s235, %s237
      %p241 = scmp.eq.s32.totalorder %s30, 0
      %p242 = por %p240, %p241
      %p243 = scmp.ne.s32.totalorder %s235, %s237
      %p244 = scmp.eq.s32.totalorder %s35, 1
      %p245 = por %p243, %p244
      %p246 = scmp.ne.s32.totalorder %s237, %s238
      %p247 = scmp.eq.s32.totalorder %s35, 0
      %p248 = por %p246, %p247
      %p249 = scmp.ne.s32.totalorder %s237, %s238
      %p250 = scmp.eq.s32.totalorder %s36, 1
      %p251 = por %p249, %p250
      %p253 = scmp.ne.s32.totalorder %s238, %s252
      %p254 = scmp.eq.s32.totalorder %s36, 0
      %p255 = por %p253, %p254
      %s257 = sadd.s32 %s256, 1
      %p260 = scmp.eq.s32.totalorder %s30, 1
      %p261 = scmp.ne.s32.totalorder %s256, %s258
      %p262 = scmp.eq.s32.totalorder %s30, 0
      %p263 = por %p261, %p262
      %p264 = scmp.ne.s32.totalorder %s256, %s258
      %p265 = scmp.eq.s32.totalorder %s35, 1
      %p266 = por %p264, %p265
      %p267 = scmp.ne.s32.totalorder %s258, %s259
      %p268 = scmp.eq.s32.totalorder %s35, 0
      %p269 = por %p267, %p268
      %p270 = scmp.ne.s32.totalorder %s258, %s259
      %p271 = scmp.eq.s32.totalorder %s36, 1
      %p272 = por %p270, %p271
      %p274 = scmp.ne.s32.totalorder %s259, %s273
      %p275 = scmp.eq.s32.totalorder %s36, 0
      %p276 = por %p274, %p275
      %s277 = ssub.s32 %s37, %s49
      %s278 = ssub.s32 %s38, %s45
      %s279 = sor.u32 %s277, %s278
      %p280 = scmp.eq.s32.totalorder %s279, 0
      %s282 = sadd.s32 %s281, 1
      %s283 = scalar_select %p280, %s281, %s282
      %p286 = pneg %p280
      %p287 = scmp.eq.s32.totalorder %s30, 1
      %p288 = por %p286, %p287
      %p289 = scmp.ne.s32.totalorder %s281, %s284
      %p290 = scmp.eq.s32.totalorder %s30, 0
      %p291 = por %p289, %p290
      %p292 = scmp.ne.s32.totalorder %s281, %s284
      %p293 = scmp.eq.s32.totalorder %s35, 1
      %p294 = por %p292, %p293
      %p295 = scmp.ne.s32.totalorder %s284, %s285
      %p296 = scmp.eq.s32.totalorder %s35, 0
      %p297 = por %p295, %p296
      %p298 = scmp.ne.s32.totalorder %s284, %s285
      %p299 = scmp.eq.s32.totalorder %s36, 1
      %p300 = por %p298, %p299
      %p302 = scmp.ne.s32.totalorder %s285, %s301
      %p303 = scmp.eq.s32.totalorder %s36, 0
      %p304 = por %p302, %p303
      %s305 = ssub.s32 %s37, %s49
      %s306 = ssub.s32 %s38, %s45
      %s307 = sor.u32 %s305, %s306
      %p308 = scmp.eq.s32.totalorder %s307, 0
      %s310 = sadd.s32 %s309, 1
      %s311 = scalar_select %p308, %s309, %s310
      %p314 = pneg %p308
      %p315 = scmp.eq.s32.totalorder %s30, 1
      %p316 = por %p314, %p315
      %p317 = scmp.ne.s32.totalorder %s309, %s312
      %p318 = scmp.eq.s32.totalorder %s30, 0
      %p319 = por %p317, %p318
      %p320 = scmp.ne.s32.totalorder %s309, %s312
      %p321 = scmp.eq.s32.totalorder %s35, 1
      %p322 = por %p320, %p321
      %p323 = scmp.ne.s32.totalorder %s312, %s313
      %p324 = scmp.eq.s32.totalorder %s35, 0
      %p325 = por %p323, %p324
      %p326 = scmp.ne.s32.totalorder %s312, %s313
      %p327 = scmp.eq.s32.totalorder %s36, 1
      %p328 = por %p326, %p327
      %p330 = scmp.ne.s32.totalorder %s313, %s329
      %p331 = scmp.eq.s32.totalorder %s36, 0
      %p332 = por %p330, %p331
      %p333 = scmp.le.s32.totalorder 1, %s30
      %p334 = scmp.lt.s32.totalorder %s30, 3
      %p335 = pnand %p333, %p334
      %p336 = pneg %p335
      // Predicated region
      $region9: #{tpu_custom_call.1} parent=5 // pred_check
        _
      $region10: #{tpu_custom_call.1} parent=5 // pred_check_branch
        %338 = sbr.rel (%p335) target = $region12
      $region11: #{tpu_custom_call.1} parent=5 // pred_region
        %s339 = ssub.s32 %s30, 1
        // Predicated region
        $region13: #{tpu_custom_call.1} parent=11 // pred_check
          %p340 = pneg %p143
        $region14: #{tpu_custom_call.1} parent=11 // pred_check_branch
          %342 = sbr.rel (%p340) target = $region16
        $region15: #{tpu_custom_call.1} parent=11 // pred_region
          _
        $region16: #{tpu_custom_call.1} parent=11 // pred_fallthru
          _
        // Predicated region
        $region17: #{tpu_custom_call.1} parent=11 // pred_check
          %p343 = pneg %p164
        $region18: #{tpu_custom_call.1} parent=11 // pred_check_branch
          %345 = sbr.rel (%p343) target = $region20
        $region19: #{tpu_custom_call.1} parent=11 // pred_region
          _
        $region20: #{tpu_custom_call.1} parent=11 // pred_fallthru
          _
        // Predicated region
        $region21: #{tpu_custom_call.1} parent=11 // pred_check
          %p346 = pneg %p185
        $region22: #{tpu_custom_call.1} parent=11 // pred_check_branch
          %348 = sbr.rel (%p346) target = $region24
        $region23: #{tpu_custom_call.1} parent=11 // pred_region
          %s350 = ssub.s32 512, 512
          %351 = vsyncadd [#allocation6], %s350
          %s352 = sshll.u32 [#allocation7], 4
          %s353 = int_to_ptr.vmem [resolvable:$true] %s352
          %358 = dma.hbm_to_vmem [thread:$0]  %s5, 512, %s353, [#allocation6], 128, 128, 8
        $region24: #{tpu_custom_call.1} parent=11 // pred_fallthru
          _
        // Predicated region
        $region25: #{tpu_custom_call.1} parent=11 // pred_check
          %p359 = pneg %p206
        $region26: #{tpu_custom_call.1} parent=11 // pred_check_branch
          %361 = sbr.rel (%p359) target = $region28
        $region27: #{tpu_custom_call.1} parent=11 // pred_region
          _
        $region28: #{tpu_custom_call.1} parent=11 // pred_fallthru
          _
        // Predicated region
        $region29: #{tpu_custom_call.1} parent=11 // pred_check
          %p362 = pneg %p227
        $region30: #{tpu_custom_call.1} parent=11 // pred_check_branch
          %364 = sbr.rel (%p362) target = $region32
        $region31: #{tpu_custom_call.1} parent=11 // pred_region
          _
        $region32: #{tpu_custom_call.1} parent=11 // pred_fallthru
          _
        // Predicated region
        $region33: #{tpu_custom_call.1} parent=11 // pred_check
          %p365 = pneg %p248
        $region34: #{tpu_custom_call.1} parent=11 // pred_check_branch
          %367 = sbr.rel (%p365) target = $region36
        $region35: #{tpu_custom_call.1} parent=11 // pred_region
          _
        $region36: #{tpu_custom_call.1} parent=11 // pred_fallthru
          _
        // Predicated region
        $region37: #{tpu_custom_call.1} parent=11 // pred_check
          %p368 = pneg %p269
        $region38: #{tpu_custom_call.1} parent=11 // pred_check_branch
          %370 = sbr.rel (%p368) target = $region40
        $region39: #{tpu_custom_call.1} parent=11 // pred_region
          _
        $region40: #{tpu_custom_call.1} parent=11 // pred_fallthru
          _
      $region12: #{tpu_custom_call.1} parent=5 // pred_fallthru
        _
      %p371 = scmp.lt.s32.totalorder %s30, 2
      // Predicated region
      $region41: #{tpu_custom_call.1} parent=5 // pred_check
        %p372 = pneg %p371
      $region42: #{tpu_custom_call.1} parent=5 // pred_check_branch
        %374 = sbr.rel (%p372) target = $region44
      $region43: #{tpu_custom_call.1} parent=5 // pred_region
        // Predicated region
        $region45: #{tpu_custom_call.1} parent=43 // pred_check
          %p375 = pneg %p64
        $region46: #{tpu_custom_call.1} parent=43 // pred_check_branch
          %377 = sbr.rel (%p375) target = $region48
        $region47: #{tpu_custom_call.1} parent=43 // pred_region
          %p378 = scmp.lt.s32.totalorder %s37, 1
          %s379 = scalar_select %p378, %s37, 1
          %p380 = scmp.lt.s32.totalorder %s38, 0
          %s381 = scalar_select %p380, %s38, 0
          %s382 = sadd.s32 %s381, %s379
          %s383 = smul.addr %s382, 8
          %s384 = scalar_lea.vmem %s0, %s383
        $region48: #{tpu_custom_call.1} parent=43 // pred_fallthru
          _
        // Predicated region
        $region49: #{tpu_custom_call.1} parent=43 // pred_check
          %p385 = pneg %p90
        $region50: #{tpu_custom_call.1} parent=43 // pred_check_branch
          %387 = sbr.rel (%p385) target = $region52
        $region51: #{tpu_custom_call.1} parent=43 // pred_region
          %s388 = sand.u32 %s80, 1
          %s389 = scalar_lea.sflag [#allocation3], %s388
          %s390 = sand.u32 %s80, 1
          %s391 = smul.addr %s390, 8
          %s392 = scalar_lea.vmem [#allocation2], %s391
          %s394 = ssub.s32 128, 128
          %395 = vsyncadd %s389, %s394
          %s396 = smul.addr %s37, 128
          %s397 = scalar_lea.hbm %s1, %s396
          %s399 = sshll.u32 %s392, 4
          %s400 = int_to_ptr.vmem [resolvable:$true] %s399
          %402 = dma.hbm_to_vmem [thread:$0]  %s397, 128, %s400, %s389
        $region52: #{tpu_custom_call.1} parent=43 // pred_fallthru
          _
        // Predicated region
        $region53: #{tpu_custom_call.1} parent=43 // pred_check
          %p403 = pneg %p116
        $region54: #{tpu_custom_call.1} parent=43 // pred_check_branch
          %405 = sbr.rel (%p403) target = $region56
        $region55: #{tpu_custom_call.1} parent=43 // pred_region
          %s406 = sand.u32 %s30, 1
          %s407 = scalar_lea.sflag [#allocation6], %s406
          %s408 = sand.u32 %s106, 1
          %s409 = smul.addr %s408, 8
          %s410 = scalar_lea.vmem [#allocation5], %s409
          %s412 = ssub.s32 128, 128
          %413 = vsyncadd %s407, %s412
          %s414 = smul.addr %s37, 128
          %s415 = scalar_lea.hbm %s2, %s414
          %s417 = sshll.u32 %s410, 4
          %s418 = int_to_ptr.vmem [resolvable:$true] %s417
          %420 = dma.hbm_to_vmem [thread:$0]  %s415, 128, %s418, %s407
        $region56: #{tpu_custom_call.1} parent=43 // pred_fallthru
          _
      $region44: #{tpu_custom_call.1} parent=5 // pred_fallthru
        _
      %p421 = scmp.le.s32.totalorder 1, %s30
      %p422 = scmp.lt.s32.totalorder %s30, 3
      %p423 = pnand %p421, %p422
      %p424 = pneg %p423
      // Predicated region
      $region57: #{tpu_custom_call.1} parent=5 // pred_check
        _
      $region58: #{tpu_custom_call.1} parent=5 // pred_check_branch
        %426 = sbr.rel (%p423) target = $region60
      $region59: #{tpu_custom_call.1} parent=5 // pred_region
        %s427 = ssub.s32 %s30, 1
        %s428 = sand.u32 %s83, 1
        %s429 = scalar_lea.sflag [#allocation3], %s428
        %s430 = sand.u32 %s83, 1
        %s431 = smul.addr %s430, 8
        %s432 = scalar_lea.vmem [#allocation2], %s431
        // Predicated region
        $region61: #{tpu_custom_call.1} parent=59 // pred_check
          %p433 = pneg %p96
        $region62: #{tpu_custom_call.1} parent=59 // pred_check_branch
          %435 = sbr.rel (%p433) target = $region64
        $region63: #{tpu_custom_call.1} parent=59 // pred_region
          %436 = dma.done %s429, 128
        $region64: #{tpu_custom_call.1} parent=59 // pred_fallthru
          _
        %s437 = sand.u32 %s35, 1
        %s438 = scalar_lea.sflag [#allocation6], %s437
        %s439 = sand.u32 %s109, 1
        %s440 = smul.addr %s439, 8
        %s441 = scalar_lea.vmem [#allocation5], %s440
        // Predicated region
        $region65: #{tpu_custom_call.1} parent=59 // pred_check
          %p442 = pneg %p122
        $region66: #{tpu_custom_call.1} parent=59 // pred_check_branch
          %444 = sbr.rel (%p442) target = $region68
        $region67: #{tpu_custom_call.1} parent=59 // pred_region
          %445 = dma.done %s438, 128
        $region68: #{tpu_custom_call.1} parent=59 // pred_fallthru
          _
        // Predicated region
        $region69: #{tpu_custom_call.1} parent=59 // pred_check
          %p446 = pneg %p185
        $region70: #{tpu_custom_call.1} parent=59 // pred_check_branch
          %448 = sbr.rel (%p446) target = $region72
        $region71: #{tpu_custom_call.1} parent=59 // pred_region
          %449 = dma.done [#allocation6], 512
        $region72: #{tpu_custom_call.1} parent=59 // pred_fallthru
          _
        %p450 = scmp.lt.s32.totalorder %s39, 1
        %s451 = scalar_select %p450, %s39, 1
        %p452 = scmp.lt.s32.totalorder %s40, 0
        %s453 = scalar_select %p452, %s40, 0
        %s454 = sadd.s32 %s453, %s451
        %s455 = smul.addr %s454, 8
        %s456 = scalar_lea.vmem %s0, %s455
        %p457 = pneg %p70
        %p458 = pneg %p67
        %s459 = sand.u32 %s83, 1
        %s460 = scalar_lea.sflag [#allocation3], %s459
        %s461 = sand.u32 %s83, 1
        %s462 = smul.addr %s461, 8
        %s463 = scalar_lea.vmem [#allocation2], %s462
        %p464 = pneg %p96
        %p465 = pneg %p93
        %s466 = sand.u32 %s35, 1
        %s467 = scalar_lea.sflag [#allocation6], %s466
        %s468 = sand.u32 %s109, 1
        %s469 = smul.addr %s468, 8
        %s470 = scalar_lea.vmem [#allocation5], %s469
        %p471 = pneg %p122
        %p472 = pneg %p119
        %p473 = pneg %p143
        %p474 = pneg %p140
        %p475 = pneg %p164
        %p476 = pneg %p161
        %p477 = pneg %p185
        %p478 = pneg %p182
        %p479 = pneg %p206
        %p480 = pneg %p203
        %p481 = pneg %p227
        %p482 = pneg %p224
        %p483 = pneg %p248
        %p484 = pneg %p245
        %p485 = pneg %p269
        %p486 = pneg %p266
        %p487 = pneg %p297
        %p488 = pneg %p294
        %s489 = sand.u32 %s284, 1
        %s490 = scalar_lea.sflag [#allocation4], %s489
        %s491 = sand.u32 %s284, 1
        %s492 = smul.addr %s491, 8
        %s493 = scalar_lea.vmem [#allocation8], %s492
        %p494 = pneg %p325
        %p495 = pneg %p322
        %s496 = sand.u32 %s312, 1
        %s497 = scalar_lea.sflag [#allocation10], %s496
        %s498 = sand.u32 %s312, 1
        %s499 = smul.addr %s498, 32
        %s500 = scalar_lea.vmem [#allocation9], %s499
        %p501 = scmp.lt.s32.totalorder %s39, 1
        %s502 = scalar_select %p501, %s39, 1
        %p503 = scmp.lt.s32.totalorder %s40, 0
        %s504 = scalar_select %p503, %s40, 0
        %s505 = sadd.s32 %s504, %s502
        %s506 = smul.addr %s505, 8
        %s507 = scalar_lea.vmem %s0, %s506
        %s508 = smul.u32 8, %s40
        %v509 = vld [vmem:[%s507] sm:$0xff]
        %v510 = vld [vmem:[%s432] sm:$0xff]
        %v511 = vld [vmem:[%s441] sm:$0xff]
        %v512 = vld [vmem:[%s3] sm:$0xff]
        %v513 = vld [vmem:[%s3 + $0x8] sm:$0xff]
        %v514 = vld [vmem:[%s3 + $0x10] sm:$0xff]
        %v515 = vld [vmem:[%s3 + $0x18] sm:$0xff]
        %v516 = vld [vmem:[%s4] sm:$0x1]
        %v518 = vlaneseq
        %v519 = vshrl.u32 %v518, 7
        %v520 = vsub.s32 0, %v519
        %v521 = vrot.slane %v516, %v520
        %vm523 = vcmask 261120
        %v525 = vsel %vm523, %v509, 0
        %527 = vmatprep.subr.mxu0 0.0
        %528 = vmatpush1.msra.mxu0 %v512
        %529 = vmatprep.subr.mxu0 0.0
        %530 = vmatpush1.msra.mxu0 %v513
        %531 = vmatprep.subr.mxu0 0.0
        %532 = vmatpush1.msra.mxu0 %v514
        %533 = vmatprep.subr.mxu0 0.0
        %534 = vmatpush1.msra.mxu0 %v515
        %535 = vmatprep.subr.mxu0 0.0
        %536 = vmatpush1.msra.mxu0 0.0
        %537 = vmatprep.subr.mxu0 0.0
        %538 = vmatpush1.msra.mxu0 0.0
        %539 = vmatprep.subr.mxu0 0.0
        %540 = vmatpush1.msra.mxu0 0.0
        %541 = vmatprep.subr.mxu0 0.0
        %542 = vmatpush1.msra.mxu0 0.0
        %543 = vmatprep.subr.mxu0 0.0
        %544 = vmatpush1.msra.mxu0 0.0
        %545 = vmatprep.subr.mxu0 0.0
        %546 = vmatpush1.msra.mxu0 0.0
        %547 = vmatprep.subr.mxu0 0.0
        %548 = vmatpush1.msra.mxu0 0.0
        %549 = vmatprep.subr.mxu0 0.0
        %550 = vmatpush1.msra.mxu0 0.0
        %551 = vmatprep.subr.mxu0 0.0
        %552 = vmatpush1.msra.mxu0 0.0
        %553 = vmatprep.subr.mxu0 0.0
        %554 = vmatpush1.msra.mxu0 0.0
        %555 = vmatprep.subr.mxu0 0.0
        %556 = vmatpush1.msra.mxu0 0.0
        %557 = vmatprep.subr.mxu0 0.0
        %558 = vmatpush1.msra.mxu0 0.0
        %559 = vmatprep.subr.mxu0 0.0
        %560 = vmatpush1.msra.mxu0 0.0
        %561 = vmatprep.subr.mxu0 0.0
        %562 = vmatpush1.msra.mxu0 0.0
        %563 = vmatprep.subr.mxu0 0.0
        %564 = vmatpush1.msra.mxu0 0.0
        %565 = vmatprep.subr.mxu0 0.0
        %566 = vmatpush1.msra.mxu0 0.0
        %567 = vmatprep.subr.mxu0 0.0
        %568 = vmatpush1.msra.mxu0 0.0
        %569 = vmatprep.subr.mxu0 0.0
        %570 = vmatpush1.msra.mxu0 0.0
        %571 = vmatprep.subr.mxu0 0.0
        %572 = vmatpush1.msra.mxu0 0.0
        %573 = vmatprep.subr.mxu0 0.0
        %574 = vmatpush1.msra.mxu0 0.0
        %575 = vmatprep.subr.mxu0 0.0
        %576 = vmatpush1.msra.mxu0 0.0
        %577 = vmatprep.subr.mxu0 0.0
        %578 = vmatpush1.msra.mxu0 0.0
        %579 = vmatprep.subr.mxu0 0.0
        %580 = vmatpush1.msra.mxu0 0.0
        %581 = vmatprep.subr.mxu0 0.0
        %582 = vmatpush1.msra.mxu0 0.0
        %583 = vmatprep.subr.mxu0 0.0
        %584 = vmatpush1.msra.mxu0 0.0
        %585 = vmatprep.subr.mxu0 0.0
        %586 = vmatpush1.msra.mxu0 0.0
        %587 = vmatprep.subr.mxu0 0.0
        %588 = vmatpush1.msra.mxu0 0.0
        %589 = vmatprep.subr.mxu0 0.0
        %590 = vmatpush1.msra.mxu0 0.0
        %591 = vmatprep.mubr.f32.mxu0 0.0
        %592 = vmatmul.mubr.f32.gmra.mrb[0].mxu0 %v525
        %v593 = vpop.f32.mrb[0].mxu0
        %v594 = vadd.f32 %v521, %v593
        %v595 = vpop.f32.mrb[0].mxu0
        %596 = vdwg.mxu0
        %v597 = vld [vmem:[#allocation7] sm:$0xff]
        %v598 = vld [vmem:[#allocation7 + $0x8] sm:$0xff]
        %v599 = vld [vmem:[#allocation7 + $0x10] sm:$0xff]
        %v600 = vld [vmem:[#allocation7 + $0x18] sm:$0xff]
        %v601 = vld [vmem:[%s6] sm:$0x1]
        %v603 = vlaneseq
        %v604 = vshrl.u32 %v603, 7
        %v605 = vsub.s32 0, %v604
        %v606 = vrot.slane %v601, %v605
        %v609 = vsel %vm523, %v510, 0
        %611 = vmatprep.subr.mxu0 0.0
        %612 = vmatpush1.msra.mxu0 %v597
        %613 = vmatprep.subr.mxu0 0.0
        %614 = vmatpush1.msra.mxu0 %v598
        %615 = vmatprep.subr.mxu0 0.0
        %616 = vmatpush1.msra.mxu0 %v599
        %617 = vmatprep.subr.mxu0 0.0
        %618 = vmatpush1.msra.mxu0 %v600
        %619 = vmatprep.subr.mxu0 0.0
        %620 = vmatpush1.msra.mxu0 0.0
        %621 = vmatprep.subr.mxu0 0.0
        %622 = vmatpush1.msra.mxu0 0.0
        %623 = vmatprep.subr.mxu0 0.0
        %624 = vmatpush1.msra.mxu0 0.0
        %625 = vmatprep.subr.mxu0 0.0
        %626 = vmatpush1.msra.mxu0 0.0
        %627 = vmatprep.subr.mxu0 0.0
        %628 = vmatpush1.msra.mxu0 0.0
        %629 = vmatprep.subr.mxu0 0.0
        %630 = vmatpush1.msra.mxu0 0.0
        %631 = vmatprep.subr.mxu0 0.0
        %632 = vmatpush1.msra.mxu0 0.0
        %633 = vmatprep.subr.mxu0 0.0
        %634 = vmatpush1.msra.mxu0 0.0
        %635 = vmatprep.subr.mxu0 0.0
        %636 = vmatpush1.msra.mxu0 0.0
        %637 = vmatprep.subr.mxu0 0.0
        %638 = vmatpush1.msra.mxu0 0.0
        %639 = vmatprep.subr.mxu0 0.0
        %640 = vmatpush1.msra.mxu0 0.0
        %641 = vmatprep.subr.mxu0 0.0
        %642 = vmatpush1.msra.mxu0 0.0
        %643 = vmatprep.subr.mxu0 0.0
        %644 = vmatpush1.msra.mxu0 0.0
        %645 = vmatprep.subr.mxu0 0.0
        %646 = vmatpush1.msra.mxu0 0.0
        %647 = vmatprep.subr.mxu0 0.0
        %648 = vmatpush1.msra.mxu0 0.0
        %649 = vmatprep.subr.mxu0 0.0
        %650 = vmatpush1.msra.mxu0 0.0
        %651 = vmatprep.subr.mxu0 0.0
        %652 = vmatpush1.msra.mxu0 0.0
        %653 = vmatprep.subr.mxu0 0.0
        %654 = vmatpush1.msra.mxu0 0.0
        %655 = vmatprep.subr.mxu0 0.0
        %656 = vmatpush1.msra.mxu0 0.0
        %657 = vmatprep.subr.mxu0 0.0
        %658 = vmatpush1.msra.mxu0 0.0
        %659 = vmatprep.subr.mxu0 0.0
        %660 = vmatpush1.msra.mxu0 0.0
        %661 = vmatprep.subr.mxu0 0.0
        %662 = vmatpush1.msra.mxu0 0.0
        %663 = vmatprep.subr.mxu0 0.0
        %664 = vmatpush1.msra.mxu0 0.0
        %665 = vmatprep.subr.mxu0 0.0
        %666 = vmatpush1.msra.mxu0 0.0
        %667 = vmatprep.subr.mxu0 0.0
        %668 = vmatpush1.msra.mxu0 0.0
        %669 = vmatprep.subr.mxu0 0.0
        %670 = vmatpush1.msra.mxu0 0.0
        %671 = vmatprep.subr.mxu0 0.0
        %672 = vmatpush1.msra.mxu0 0.0
        %673 = vmatprep.subr.mxu0 0.0
        %674 = vmatpush1.msra.mxu0 0.0
        %675 = vmatprep.mubr.f32.mxu0 0.0
        %676 = vmatmul.mubr.f32.gmra.mrb[0].mxu0 %v609
        %v677 = vpop.f32.mrb[0].mxu0
        %v678 = vadd.f32 %v606, %v677
        %v679 = vpop.f32.mrb[0].mxu0
        %680 = vdwg.mxu0
        %v681 = vld [vmem:[%s7] sm:$0xff]
        %v682 = vld [vmem:[%s7 + $0x8] sm:$0xff]
        %v683 = vld [vmem:[%s7 + $0x10] sm:$0xff]
        %v684 = vld [vmem:[%s7 + $0x18] sm:$0xff]
        %v685 = vld [vmem:[%s8] sm:$0x1]
        %v687 = vlaneseq
        %v688 = vshrl.u32 %v687, 7
        %v689 = vsub.s32 0, %v688
        %v690 = vrot.slane %v685, %v689
        %v693 = vsel %vm523, %v511, 0
        %695 = vmatprep.subr.mxu0 0.0
        %696 = vmatpush1.msra.mxu0 %v681
        %697 = vmatprep.subr.mxu0 0.0
        %698 = vmatpush1.msra.mxu0 %v682
        %699 = vmatprep.subr.mxu0 0.0
        %700 = vmatpush1.msra.mxu0 %v683
        %701 = vmatprep.subr.mxu0 0.0
        %702 = vmatpush1.msra.mxu0 %v684
        %703 = vmatprep.subr.mxu0 0.0
        %704 = vmatpush1.msra.mxu0 0.0
        %705 = vmatprep.subr.mxu0 0.0
        %706 = vmatpush1.msra.mxu0 0.0
        %707 = vmatprep.subr.mxu0 0.0
        %708 = vmatpush1.msra.mxu0 0.0
        %709 = vmatprep.subr.mxu0 0.0
        %710 = vmatpush1.msra.mxu0 0.0
        %711 = vmatprep.subr.mxu0 0.0
        %712 = vmatpush1.msra.mxu0 0.0
        %713 = vmatprep.subr.mxu0 0.0
        %714 = vmatpush1.msra.mxu0 0.0
        %715 = vmatprep.subr.mxu0 0.0
        %716 = vmatpush1.msra.mxu0 0.0
        %717 = vmatprep.subr.mxu0 0.0
        %718 = vmatpush1.msra.mxu0 0.0
        %719 = vmatprep.subr.mxu0 0.0
        %720 = vmatpush1.msra.mxu0 0.0
        %721 = vmatprep.subr.mxu0 0.0
        %722 = vmatpush1.msra.mxu0 0.0
        %723 = vmatprep.subr.mxu0 0.0
        %724 = vmatpush1.msra.mxu0 0.0
        %725 = vmatprep.subr.mxu0 0.0
        %726 = vmatpush1.msra.mxu0 0.0
        %727 = vmatprep.subr.mxu0 0.0
        %728 = vmatpush1.msra.mxu0 0.0
        %729 = vmatprep.subr.mxu0 0.0
        %730 = vmatpush1.msra.mxu0 0.0
        %731 = vmatprep.subr.mxu0 0.0
        %732 = vmatpush1.msra.mxu0 0.0
        %733 = vmatprep.subr.mxu0 0.0
        %734 = vmatpush1.msra.mxu0 0.0
        %735 = vmatprep.subr.mxu0 0.0
        %736 = vmatpush1.msra.mxu0 0.0
        %737 = vmatprep.subr.mxu0 0.0
        %738 = vmatpush1.msra.mxu0 0.0
        %739 = vmatprep.subr.mxu0 0.0
        %740 = vmatpush1.msra.mxu0 0.0
        %741 = vmatprep.subr.mxu0 0.0
        %742 = vmatpush1.msra.mxu0 0.0
        %743 = vmatprep.subr.mxu0 0.0
        %744 = vmatpush1.msra.mxu0 0.0
        %745 = vmatprep.subr.mxu0 0.0
        %746 = vmatpush1.msra.mxu0 0.0
        %747 = vmatprep.subr.mxu0 0.0
        %748 = vmatpush1.msra.mxu0 0.0
        %749 = vmatprep.subr.mxu0 0.0
        %750 = vmatpush1.msra.mxu0 0.0
        %751 = vmatprep.subr.mxu0 0.0
        %752 = vmatpush1.msra.mxu0 0.0
        %753 = vmatprep.subr.mxu0 0.0
        %754 = vmatpush1.msra.mxu0 0.0
        %755 = vmatprep.subr.mxu0 0.0
        %756 = vmatpush1.msra.mxu0 0.0
        %757 = vmatprep.subr.mxu0 0.0
        %758 = vmatpush1.msra.mxu0 0.0
        %759 = vmatprep.mubr.f32.mxu0 0.0
        %760 = vmatmul.mubr.f32.gmra.mrb[0].mxu0 %v693
        %v761 = vpop.f32.mrb[0].mxu0
        %v762 = vadd.f32 %v690, %v761
        %v763 = vpop.f32.mrb[0].mxu0
        %764 = vdwg.mxu0
        %vm765 = vcmask 64512
        %v767 = vsel %vm765, %v594, 0
        %v770 = vsel %vm765, %v678, 0
        %772 = vmatprep.subr.mxu0 0.0
        %773 = vmatpush1.xpose.msra.mxu0 %v770
        %774 = vmatprep.subr.mxu0 0.0
        %775 = vmatpush1.xpose.msra.mxu0 0.0
        %776 = vmatprep.subr.mxu0 0.0
        %777 = vmatpush1.xpose.msra.mxu0 0.0
        %778 = vmatprep.subr.mxu0 0.0
        %779 = vmatpush1.xpose.msra.mxu0 0.0
        %780 = vmatprep.subr.mxu0 0.0
        %781 = vmatpush1.xpose.msra.mxu0 0.0
        %782 = vmatprep.subr.mxu0 0.0
        %783 = vmatpush1.xpose.msra.mxu0 0.0
        %784 = vmatprep.subr.mxu0 0.0
        %785 = vmatpush1.xpose.msra.mxu0 0.0
        %786 = vmatprep.subr.mxu0 0.0
        %787 = vmatpush1.xpose.msra.mxu0 0.0
        %788 = vmatprep.subr.mxu0 0.0
        %789 = vmatpush1.xpose.msra.mxu0 0.0
        %790 = vmatprep.subr.mxu0 0.0
        %791 = vmatpush1.xpose.msra.mxu0 0.0
        %792 = vmatprep.subr.mxu0 0.0
        %793 = vmatpush1.xpose.msra.mxu0 0.0
        %794 = vmatprep.subr.mxu0 0.0
        %795 = vmatpush1.xpose.msra.mxu0 0.0
        %796 = vmatprep.subr.mxu0 0.0
        %797 = vmatpush1.xpose.msra.mxu0 0.0
        %798 = vmatprep.subr.mxu0 0.0
        %799 = vmatpush1.xpose.msra.mxu0 0.0
        %800 = vmatprep.subr.mxu0 0.0
        %801 = vmatpush1.xpose.msra.mxu0 0.0
        %802 = vmatprep.subr.mxu0 0.0
        %803 = vmatpush1.xpose.msra.mxu0 0.0
        %804 = vmatprep.subr.mxu0 0.0
        %805 = vmatpush1.xpose.msra.mxu0 0.0
        %806 = vmatprep.subr.mxu0 0.0
        %807 = vmatpush1.xpose.msra.mxu0 0.0
        %808 = vmatprep.subr.mxu0 0.0
        %809 = vmatpush1.xpose.msra.mxu0 0.0
        %810 = vmatprep.subr.mxu0 0.0
        %811 = vmatpush1.xpose.msra.mxu0 0.0
        %812 = vmatprep.subr.mxu0 0.0
        %813 = vmatpush1.xpose.msra.mxu0 0.0
        %814 = vmatprep.subr.mxu0 0.0
        %815 = vmatpush1.xpose.msra.mxu0 0.0
        %816 = vmatprep.subr.mxu0 0.0
        %817 = vmatpush1.xpose.msra.mxu0 0.0
        %818 = vmatprep.subr.mxu0 0.0
        %819 = vmatpush1.xpose.msra.mxu0 0.0
        %820 = vmatprep.subr.mxu0 0.0
        %821 = vmatpush1.xpose.msra.mxu0 0.0
        %822 = vmatprep.subr.mxu0 0.0
        %823 = vmatpush1.xpose.msra.mxu0 0.0
        %824 = vmatprep.subr.mxu0 0.0
        %825 = vmatpush1.xpose.msra.mxu0 0.0
        %826 = vmatprep.subr.mxu0 0.0
        %827 = vmatpush1.xpose.msra.mxu0 0.0
        %828 = vmatprep.subr.mxu0 0.0
        %829 = vmatpush1.xpose.msra.mxu0 0.0
        %830 = vmatprep.subr.mxu0 0.0
        %831 = vmatpush1.xpose.msra.mxu0 0.0
        %832 = vmatprep.subr.mxu0 0.0
        %833 = vmatpush1.xpose.msra.mxu0 0.0
        %834 = vmatprep.subr.mxu0 0.0
        %835 = vmatpush1.xpose.msra.mxu0 0.0
        %836 = vmatprep.mubr.f32.mxu0 0.0
        %837 = vmatmul.mubr.f32.gmra.mrb[0].mxu0 %v767
        %v838 = vpop.f32.mrb[0].mxu0
        %v839 = vadd.f32 0.0, %v838
        %v840 = vpop.f32.mrb[0].mxu0
        %841 = vdwg.mxu0
        %v842 = vmul.f32 %v839, 0.35355338
        %v843 = vsel %vm765, %v842, -inf
        %844 = vmax.xlane.f32.xlu0 %v843
        %v845 = vpop.xlane.xlu0 %844
        %v846 = vsub.f32 %v842, %v845
        %v847 = vmul.f32 %v846, 1.442695
        %v848 = vpow.pop %v847
        %v849 = vsel %vm765, %v848, 0.0
        %850 = vadd.xlane.f32.xlu0 %v849
        %v851 = vpop.xlane.xlu0 %850
        %v852 = vrcp.pop %v851
        %v853 = vmul.f32 %v848, %v852
        %854 = vrot.lane.b32.xlu0 %v594, 120
        %v855 = vpop.permute.xlu0 %854
        %856 = vrot.lane.b32.xlu0 %v678, 120
        %v857 = vpop.permute.xlu0 %856
        %v858 = vsel %vm765, %v855, 0
        %v860 = vsel %vm765, %v857, 0
        %862 = vmatprep.subr.mxu0 0.0
        %863 = vmatpush1.xpose.msra.mxu0 %v860
        %864 = vmatprep.subr.mxu0 0.0
        %865 = vmatpush1.xpose.msra.mxu0 0.0
        %866 = vmatprep.subr.mxu0 0.0
        %867 = vmatpush1.xpose.msra.mxu0 0.0
        %868 = vmatprep.subr.mxu0 0.0
        %869 = vmatpush1.xpose.msra.mxu0 0.0
        %870 = vmatprep.subr.mxu0 0.0
        %871 = vmatpush1.xpose.msra.mxu0 0.0
        %872 = vmatprep.subr.mxu0 0.0
        %873 = vmatpush1.xpose.msra.mxu0 0.0
        %874 = vmatprep.subr.mxu0 0.0
        %875 = vmatpush1.xpose.msra.mxu0 0.0
        %876 = vmatprep.subr.mxu0 0.0
        %877 = vmatpush1.xpose.msra.mxu0 0.0
        %878 = vmatprep.subr.mxu0 0.0
        %879 = vmatpush1.xpose.msra.mxu0 0.0
        %880 = vmatprep.subr.mxu0 0.0
        %881 = vmatpush1.xpose.msra.mxu0 0.0
        %882 = vmatprep.subr.mxu0 0.0
        %883 = vmatpush1.xpose.msra.mxu0 0.0
        %884 = vmatprep.subr.mxu0 0.0
        %885 = vmatpush1.xpose.msra.mxu0 0.0
        %886 = vmatprep.subr.mxu0 0.0
        %887 = vmatpush1.xpose.msra.mxu0 0.0
        %888 = vmatprep.subr.mxu0 0.0
        %889 = vmatpush1.xpose.msra.mxu0 0.0
        %890 = vmatprep.subr.mxu0 0.0
        %891 = vmatpush1.xpose.msra.mxu0 0.0
        %892 = vmatprep.subr.mxu0 0.0
        %893 = vmatpush1.xpose.msra.mxu0 0.0
        %894 = vmatprep.subr.mxu0 0.0
        %895 = vmatpush1.xpose.msra.mxu0 0.0
        %896 = vmatprep.subr.mxu0 0.0
        %897 = vmatpush1.xpose.msra.mxu0 0.0
        %898 = vmatprep.subr.mxu0 0.0
        %899 = vmatpush1.xpose.msra.mxu0 0.0
        %900 = vmatprep.subr.mxu0 0.0
        %901 = vmatpush1.xpose.msra.mxu0 0.0
        %902 = vmatprep.subr.mxu0 0.0
        %903 = vmatpush1.xpose.msra.mxu0 0.0
        %904 = vmatprep.subr.mxu0 0.0
        %905 = vmatpush1.xpose.msra.mxu0 0.0
        %906 = vmatprep.subr.mxu0 0.0
        %907 = vmatpush1.xpose.msra.mxu0 0.0
        %908 = vmatprep.subr.mxu0 0.0
        %909 = vmatpush1.xpose.msra.mxu0 0.0
        %910 = vmatprep.subr.mxu0 0.0
        %911 = vmatpush1.xpose.msra.mxu0 0.0
        %912 = vmatprep.subr.mxu0 0.0
        %913 = vmatpush1.xpose.msra.mxu0 0.0
        %914 = vmatprep.subr.mxu0 0.0
        %915 = vmatpush1.xpose.msra.mxu0 0.0
        %916 = vmatprep.subr.mxu0 0.0
        %917 = vmatpush1.xpose.msra.mxu0 0.0
        %918 = vmatprep.subr.mxu0 0.0
        %919 = vmatpush1.xpose.msra.mxu0 0.0
        %920 = vmatprep.subr.mxu0 0.0
        %921 = vmatpush1.xpose.msra.mxu0 0.0
        %922 = vmatprep.subr.mxu0 0.0
        %923 = vmatpush1.xpose.msra.mxu0 0.0
        %924 = vmatprep.subr.mxu0 0.0
        %925 = vmatpush1.xpose.msra.mxu0 0.0
        %926 = vmatprep.mubr.f32.mxu0 0.0
        %927 = vmatmul.mubr.f32.gmra.mrb[0].mxu0 %v858
        %v928 = vpop.f32.mrb[0].mxu0
        %v929 = vadd.f32 0.0, %v928
        %v930 = vpop.f32.mrb[0].mxu0
        %931 = vdwg.mxu0
        %v932 = vmul.f32 %v929, 0.35355338
        %v933 = vsel %vm765, %v932, -inf
        %934 = vmax.xlane.f32.xlu0 %v933
        %v935 = vpop.xlane.xlu0 %934
        %v936 = vsub.f32 %v932, %v935
        %v937 = vmul.f32 %v936, 1.442695
        %v938 = vpow.pop %v937
        %v939 = vsel %vm765, %v938, 0.0
        %940 = vadd.xlane.f32.xlu0 %v939
        %v941 = vpop.xlane.xlu0 %940
        %v942 = vrcp.pop %v941
        %v943 = vmul.f32 %v938, %v942
        %v944 = vadd.f32 %v853, %v943
        %945 = vrot.lane.b32.xlu0 %v594, 112
        %v946 = vpop.permute.xlu0 %945
        %947 = vrot.lane.b32.xlu0 %v678, 112
        %v948 = vpop.permute.xlu0 %947
        %v949 = vsel %vm765, %v946, 0
        %v951 = vsel %vm765, %v948, 0
        %953 = vmatprep.subr.mxu0 0.0
        %954 = vmatpush1.xpose.msra.mxu0 %v951
        %955 = vmatprep.subr.mxu0 0.0
        %956 = vmatpush1.xpose.msra.mxu0 0.0
        %957 = vmatprep.subr.mxu0 0.0
        %958 = vmatpush1.xpose.msra.mxu0 0.0
        %959 = vmatprep.subr.mxu0 0.0
        %960 = vmatpush1.xpose.msra.mxu0 0.0
        %961 = vmatprep.subr.mxu0 0.0
        %962 = vmatpush1.xpose.msra.mxu0 0.0
        %963 = vmatprep.subr.mxu0 0.0
        %964 = vmatpush1.xpose.msra.mxu0 0.0
        %965 = vmatprep.subr.mxu0 0.0
        %966 = vmatpush1.xpose.msra.mxu0 0.0
        %967 = vmatprep.subr.mxu0 0.0
        %968 = vmatpush1.xpose.msra.mxu0 0.0
        %969 = vmatprep.subr.mxu0 0.0
        %970 = vmatpush1.xpose.msra.mxu0 0.0
        %971 = vmatprep.subr.mxu0 0.0
        %972 = vmatpush1.xpose.msra.mxu0 0.0
        %973 = vmatprep.subr.mxu0 0.0
        %974 = vmatpush1.xpose.msra.mxu0 0.0
        %975 = vmatprep.subr.mxu0 0.0
        %976 = vmatpush1.xpose.msra.mxu0 0.0
        %977 = vmatprep.subr.mxu0 0.0
        %978 = vmatpush1.xpose.msra.mxu0 0.0
        %979 = vmatprep.subr.mxu0 0.0
        %980 = vmatpush1.xpose.msra.mxu0 0.0
        %981 = vmatprep.subr.mxu0 0.0
        %982 = vmatpush1.xpose.msra.mxu0 0.0
        %983 = vmatprep.subr.mxu0 0.0
        %984 = vmatpush1.xpose.msra.mxu0 0.0
        %985 = vmatprep.subr.mxu0 0.0
        %986 = vmatpush1.xpose.msra.mxu0 0.0
        %987 = vmatprep.subr.mxu0 0.0
        %988 = vmatpush1.xpose.msra.mxu0 0.0
        %989 = vmatprep.subr.mxu0 0.0
        %990 = vmatpush1.xpose.msra.mxu0 0.0
        %991 = vmatprep.subr.mxu0 0.0
        %992 = vmatpush1.xpose.msra.mxu0 0.0
        %993 = vmatprep.subr.mxu0 0.0
        %994 = vmatpush1.xpose.msra.mxu0 0.0
        %995 = vmatprep.subr.mxu0 0.0
        %996 = vmatpush1.xpose.msra.mxu0 0.0
        %997 = vmatprep.subr.mxu0 0.0
        %998 = vmatpush1.xpose.msra.mxu0 0.0
        %999 = vmatprep.subr.mxu0 0.0
        %1000 = vmatpush1.xpose.msra.mxu0 0.0
        %1001 = vmatprep.subr.mxu0 0.0
        %1002 = vmatpush1.xpose.msra.mxu0 0.0
        %1003 = vmatprep.subr.mxu0 0.0
        %1004 = vmatpush1.xpose.msra.mxu0 0.0
        %1005 = vmatprep.subr.mxu0 0.0
        %1006 = vmatpush1.xpose.msra.mxu0 0.0
        %1007 = vmatprep.subr.mxu0 0.0
        %1008 = vmatpush1.xpose.msra.mxu0 0.0
        %1009 = vmatprep.subr.mxu0 0.0
        %1010 = vmatpush1.xpose.msra.mxu0 0.0
        %1011 = vmatprep.subr.mxu0 0.0
        %1012 = vmatpush1.xpose.msra.mxu0 0.0
        %1013 = vmatprep.subr.mxu0 0.0
        %1014 = vmatpush1.xpose.msra.mxu0 0.0
        %1015 = vmatprep.subr.mxu0 0.0
        %1016 = vmatpush1.xpose.msra.mxu0 0.0
        %1017 = vmatprep.mubr.f32.mxu0 0.0
        %1018 = vmatmul.mubr.f32.gmra.mrb[0].mxu0 %v949
        %v1019 = vpop.f32.mrb[0].mxu0
        %v1020 = vadd.f32 0.0, %v1019
        %v1021 = vpop.f32.mrb[0].mxu0
        %1022 = vdwg.mxu0
        %v1023 = vmul.f32 %v1020, 0.35355338
        %v1024 = vsel %vm765, %v1023, -inf
        %1025 = vmax.xlane.f32.xlu0 %v1024
        %v1026 = vpop.xlane.xlu0 %1025
        %v1027 = vsub.f32 %v1023, %v1026
        %v1028 = vmul.f32 %v1027, 1.442695
        %v1029 = vpow.pop %v1028
        %v1030 = vsel %vm765, %v1029, 0.0
        %1031 = vadd.xlane.f32.xlu0 %v1030
        %v1032 = vpop.xlane.xlu0 %1031
        %v1033 = vrcp.pop %v1032
        %v1034 = vmul.f32 %v1029, %v1033
        %v1035 = vadd.f32 %v944, %v1034
        %1036 = vrot.lane.b32.xlu0 %v594, 104
        %v1037 = vpop.permute.xlu0 %1036
        %1038 = vrot.lane.b32.xlu0 %v678, 104
        %v1039 = vpop.permute.xlu0 %1038
        %v1040 = vsel %vm765, %v1037, 0
        %v1042 = vsel %vm765, %v1039, 0
        %1044 = vmatprep.subr.mxu0 0.0
        %1045 = vmatpush1.xpose.msra.mxu0 %v1042
        %1046 = vmatprep.subr.mxu0 0.0
        %1047 = vmatpush1.xpose.msra.mxu0 0.0
        %1048 = vmatprep.subr.mxu0 0.0
        %1049 = vmatpush1.xpose.msra.mxu0 0.0
        %1050 = vmatprep.subr.mxu0 0.0
        %1051 = vmatpush1.xpose.msra.mxu0 0.0
        %1052 = vmatprep.subr.mxu0 0.0
        %1053 = vmatpush1.xpose.msra.mxu0 0.0
        %1054 = vmatprep.subr.mxu0 0.0
        %1055 = vmatpush1.xpose.msra.mxu0 0.0
        %1056 = vmatprep.subr.mxu0 0.0
        %1057 = vmatpush1.xpose.msra.mxu0 0.0
        %1058 = vmatprep.subr.mxu0 0.0
        %1059 = vmatpush1.xpose.msra.mxu0 0.0
        %1060 = vmatprep.subr.mxu0 0.0
        %1061 = vmatpush1.xpose.msra.mxu0 0.0
        %1062 = vmatprep.subr.mxu0 0.0
        %1063 = vmatpush1.xpose.msra.mxu0 0.0
        %1064 = vmatprep.subr.mxu0 0.0
        %1065 = vmatpush1.xpose.msra.mxu0 0.0
        %1066 = vmatprep.subr.mxu0 0.0
        %1067 = vmatpush1.xpose.msra.mxu0 0.0
        %1068 = vmatprep.subr.mxu0 0.0
        %1069 = vmatpush1.xpose.msra.mxu0 0.0
        %1070 = vmatprep.subr.mxu0 0.0
        %1071 = vmatpush1.xpose.msra.mxu0 0.0
        %1072 = vmatprep.subr.mxu0 0.0
        %1073 = vmatpush1.xpose.msra.mxu0 0.0
        %1074 = vmatprep.subr.mxu0 0.0
        %1075 = vmatpush1.xpose.msra.mxu0 0.0
        %1076 = vmatprep.subr.mxu0 0.0
        %1077 = vmatpush1.xpose.msra.mxu0 0.0
        %1078 = vmatprep.subr.mxu0 0.0
        %1079 = vmatpush1.xpose.msra.mxu0 0.0
        %1080 = vmatprep.subr.mxu0 0.0
        %1081 = vmatpush1.xpose.msra.mxu0 0.0
        %1082 = vmatprep.subr.mxu0 0.0
        %1083 = vmatpush1.xpose.msra.mxu0 0.0
        %1084 = vmatprep.subr.mxu0 0.0
        %1085 = vmatpush1.xpose.msra.mxu0 0.0
        %1086 = vmatprep.subr.mxu0 0.0
        %1087 = vmatpush1.xpose.msra.mxu0 0.0
        %1088 = vmatprep.subr.mxu0 0.0
        %1089 = vmatpush1.xpose.msra.mxu0 0.0
        %1090 = vmatprep.subr.mxu0 0.0
        %1091 = vmatpush1.xpose.msra.mxu0 0.0
        %1092 = vmatprep.subr.mxu0 0.0
        %1093 = vmatpush1.xpose.msra.mxu0 0.0
        %1094 = vmatprep.subr.mxu0 0.0
        %1095 = vmatpush1.xpose.msra.mxu0 0.0
        %1096 = vmatprep.subr.mxu0 0.0
        %1097 = vmatpush1.xpose.msra.mxu0 0.0
        %1098 = vmatprep.subr.mxu0 0.0
        %1099 = vmatpush1.xpose.msra.mxu0 0.0
        %1100 = vmatprep.subr.mxu0 0.0
        %1101 = vmatpush1.xpose.msra.mxu0 0.0
        %1102 = vmatprep.subr.mxu0 0.0
        %1103 = vmatpush1.xpose.msra.mxu0 0.0
        %1104 = vmatprep.subr.mxu0 0.0
        %1105 = vmatpush1.xpose.msra.mxu0 0.0
        %1106 = vmatprep.subr.mxu0 0.0
        %1107 = vmatpush1.xpose.msra.mxu0 0.0
        %1108 = vmatprep.mubr.f32.mxu0 0.0
        %1109 = vmatmul.mubr.f32.gmra.mrb[0].mxu0 %v1040
        %v1110 = vpop.f32.mrb[0].mxu0
        %v1111 = vadd.f32 0.0, %v1110
        %v1112 = vpop.f32.mrb[0].mxu0
        %1113 = vdwg.mxu0
        %v1114 = vmul.f32 %v1111, 0.35355338
        %v1115 = vsel %vm765, %v1114, -inf
        %1116 = vmax.xlane.f32.xlu0 %v1115
        %v1117 = vpop.xlane.xlu0 %1116
        %v1118 = vsub.f32 %v1114, %v1117
        %v1119 = vmul.f32 %v1118, 1.442695
        %v1120 = vpow.pop %v1119
        %v1121 = vsel %vm765, %v1120, 0.0
        %1122 = vadd.xlane.f32.xlu0 %v1121
        %v1123 = vpop.xlane.xlu0 %1122
        %v1124 = vrcp.pop %v1123
        %v1125 = vmul.f32 %v1120, %v1124
        %v1126 = vadd.f32 %v1035, %v1125
        %v1128 = vcombine.high %v853, %v853
        %v1130 = vunpack.c.l.s4 1966171168
        %v1131 = vunpack.c.0.s8 %v1130
        %v1132 = vlaneseq
        %v1133 = vshrl.u32 %v1132, 7
        %v1134 = vsub.s32 %v1131, %v1133
        %v1135 = vrot.slane %v853, %v1134
        %v1137 = vunpack.c.l.s4 1966171168
        %v1138 = vunpack.c.0.s8 %v1137
        %v1139 = vlaneseq
        %v1140 = vshrl.u32 %v1139, 7
        %v1141 = vsub.s32 %v1138, %v1140
        %v1142 = vrot.slane %v1128, %v1141
        %v1143 = vcombine.high %v1135, %v1135
        %v1144 = vcombine.high %v1142, %v1142
        %v1146 = vunpack.c.l.s4 1966171168
        %v1147 = vunpack.c.0.s8 %v1146
        %v1148 = vlaneseq
        %v1149 = vshrl.u32 %v1148, 7
        %v1150 = vsub.s32 %v1147, %v1149
        %v1151 = vrot.slane %v1135, %v1150
        %v1153 = vunpack.c.l.s4 1966171168
        %v1154 = vunpack.c.0.s8 %v1153
        %v1155 = vlaneseq
        %v1156 = vshrl.u32 %v1155, 7
        %v1157 = vsub.s32 %v1154, %v1156
        %v1158 = vrot.slane %v1142, %v1157
        %v1160 = vunpack.c.l.s4 1966171168
        %v1161 = vunpack.c.0.s8 %v1160
        %v1162 = vlaneseq
        %v1163 = vshrl.u32 %v1162, 7
        %v1164 = vsub.s32 %v1161, %v1163
        %v1165 = vrot.slane %v1143, %v1164
        %v1167 = vunpack.c.l.s4 1966171168
        %v1168 = vunpack.c.0.s8 %v1167
        %v1169 = vlaneseq
        %v1170 = vshrl.u32 %v1169, 7
        %v1171 = vsub.s32 %v1168, %v1170
        %v1172 = vrot.slane %v1144, %v1171
        %v1173 = vcombine.high %v1151, %v1151
        %v1174 = vcombine.high %v1158, %v1158
        %v1175 = vcombine.high %v1165, %v1165
        %v1176 = vcombine.high %v1172, %v1172
        %v1186 = vcombine.high %v943, %v943
        %v1188 = vunpack.c.l.s4 1966171168
        %v1189 = vunpack.c.0.s8 %v1188
        %v1190 = vlaneseq
        %v1191 = vshrl.u32 %v1190, 7
        %v1192 = vsub.s32 %v1189, %v1191
        %v1193 = vrot.slane %v943, %v1192
        %v1195 = vunpack.c.l.s4 1966171168
        %v1196 = vunpack.c.0.s8 %v1195
        %v1197 = vlaneseq
        %v1198 = vshrl.u32 %v1197, 7
        %v1199 = vsub.s32 %v1196, %v1198
        %v1200 = vrot.slane %v1186, %v1199
        %v1201 = vcombine.high %v1193, %v1193
        %v1202 = vcombine.high %v1200, %v1200
        %v1204 = vunpack.c.l.s4 1966171168
        %v1205 = vunpack.c.0.s8 %v1204
        %v1206 = vlaneseq
        %v1207 = vshrl.u32 %v1206, 7
        %v1208 = vsub.s32 %v1205, %v1207
        %v1209 = vrot.slane %v1193, %v1208
        %v1211 = vunpack.c.l.s4 1966171168
        %v1212 = vunpack.c.0.s8 %v1211
        %v1213 = vlaneseq
        %v1214 = vshrl.u32 %v1213, 7
        %v1215 = vsub.s32 %v1212, %v1214
        %v1216 = vrot.slane %v1200, %v1215
        %v1218 = vunpack.c.l.s4 1966171168
        %v1219 = vunpack.c.0.s8 %v1218
        %v1220 = vlaneseq
        %v1221 = vshrl.u32 %v1220, 7
        %v1222 = vsub.s32 %v1219, %v1221
        %v1223 = vrot.slane %v1201, %v1222
        %v1225 = vunpack.c.l.s4 1966171168
        %v1226 = vunpack.c.0.s8 %v1225
        %v1227 = vlaneseq
        %v1228 = vshrl.u32 %v1227, 7
        %v1229 = vsub.s32 %v1226, %v1228
        %v1230 = vrot.slane %v1202, %v1229
        %v1231 = vcombine.high %v1209, %v1209
        %v1232 = vcombine.high %v1216, %v1216
        %v1233 = vcombine.high %v1223, %v1223
        %v1234 = vcombine.high %v1230, %v1230
        %v1236 = vcombine.high %v1034, %v1034
        %v1238 = vunpack.c.l.s4 1966171168
        %v1239 = vunpack.c.0.s8 %v1238
        %v1240 = vlaneseq
        %v1241 = vshrl.u32 %v1240, 7
        %v1242 = vsub.s32 %v1239, %v1241
        %v1243 = vrot.slane %v1034, %v1242
        %v1245 = vunpack.c.l.s4 1966171168
        %v1246 = vunpack.c.0.s8 %v1245
        %v1247 = vlaneseq
        %v1248 = vshrl.u32 %v1247, 7
        %v1249 = vsub.s32 %v1246, %v1248
        %v1250 = vrot.slane %v1236, %v1249
        %v1251 = vcombine.high %v1243, %v1243
        %v1252 = vcombine.high %v1250, %v1250
        %v1254 = vunpack.c.l.s4 1966171168
        %v1255 = vunpack.c.0.s8 %v1254
        %v1256 = vlaneseq
        %v1257 = vshrl.u32 %v1256, 7
        %v1258 = vsub.s32 %v1255, %v1257
        %v1259 = vrot.slane %v1243, %v1258
        %v1261 = vunpack.c.l.s4 1966171168
        %v1262 = vunpack.c.0.s8 %v1261
        %v1263 = vlaneseq
        %v1264 = vshrl.u32 %v1263, 7
        %v1265 = vsub.s32 %v1262, %v1264
        %v1266 = vrot.slane %v1250, %v1265
        %v1268 = vunpack.c.l.s4 1966171168
        %v1269 = vunpack.c.0.s8 %v1268
        %v1270 = vlaneseq
        %v1271 = vshrl.u32 %v1270, 7
        %v1272 = vsub.s32 %v1269, %v1271
        %v1273 = vrot.slane %v1251, %v1272
        %v1275 = vunpack.c.l.s4 1966171168
        %v1276 = vunpack.c.0.s8 %v1275
        %v1277 = vlaneseq
        %v1278 = vshrl.u32 %v1277, 7
        %v1279 = vsub.s32 %v1276, %v1278
        %v1280 = vrot.slane %v1252, %v1279
        %v1281 = vcombine.high %v1259, %v1259
        %v1282 = vcombine.high %v1266, %v1266
        %v1283 = vcombine.high %v1273, %v1273
        %v1284 = vcombine.high %v1280, %v1280
        %v1286 = vcombine.high %v1125, %v1125
        %v1288 = vunpack.c.l.s4 1966171168
        %v1289 = vunpack.c.0.s8 %v1288
        %v1290 = vlaneseq
        %v1291 = vshrl.u32 %v1290, 7
        %v1292 = vsub.s32 %v1289, %v1291
        %v1293 = vrot.slane %v1125, %v1292
        %v1295 = vunpack.c.l.s4 1966171168
        %v1296 = vunpack.c.0.s8 %v1295
        %v1297 = vlaneseq
        %v1298 = vshrl.u32 %v1297, 7
        %v1299 = vsub.s32 %v1296, %v1298
        %v1300 = vrot.slane %v1286, %v1299
        %v1301 = vcombine.high %v1293, %v1293
        %v1302 = vcombine.high %v1300, %v1300
        %v1304 = vunpack.c.l.s4 1966171168
        %v1305 = vunpack.c.0.s8 %v1304
        %v1306 = vlaneseq
        %v1307 = vshrl.u32 %v1306, 7
        %v1308 = vsub.s32 %v1305, %v1307
        %v1309 = vrot.slane %v1293, %v1308
        %v1311 = vunpack.c.l.s4 1966171168
        %v1312 = vunpack.c.0.s8 %v1311
        %v1313 = vlaneseq
        %v1314 = vshrl.u32 %v1313, 7
        %v1315 = vsub.s32 %v1312, %v1314
        %v1316 = vrot.slane %v1300, %v1315
        %v1318 = vunpack.c.l.s4 1966171168
        %v1319 = vunpack.c.0.s8 %v1318
        %v1320 = vlaneseq
        %v1321 = vshrl.u32 %v1320, 7
        %v1322 = vsub.s32 %v1319, %v1321
        %v1323 = vrot.slane %v1301, %v1322
        %v1325 = vunpack.c.l.s4 1966171168
        %v1326 = vunpack.c.0.s8 %v1325
        %v1327 = vlaneseq
        %v1328 = vshrl.u32 %v1327, 7
        %v1329 = vsub.s32 %v1326, %v1328
        %v1330 = vrot.slane %v1302, %v1329
        %v1331 = vcombine.high %v1309, %v1309
        %v1332 = vcombine.high %v1316, %v1316
        %v1333 = vcombine.high %v1323, %v1323
        %v1334 = vcombine.high %v1330, %v1330
        %v1335 = vlaneseq
        %v1336 = vshrl.u32 %v1335, 7
        %v1337 = vsub.s32 0, %v1336
        %v1338 = vrot.slane %v1209, %v1337
        %v1339 = vlaneseq
        %v1340 = vshrl.u32 %v1339, 7
        %v1341 = vsub.s32 0, %v1340
        %v1342 = vrot.slane %v1223, %v1341
        %v1343 = vlaneseq
        %v1344 = vshrl.u32 %v1343, 7
        %v1345 = vsub.s32 0, %v1344
        %v1346 = vrot.slane %v1231, %v1345
        %v1347 = vlaneseq
        %v1348 = vshrl.u32 %v1347, 7
        %v1349 = vsub.s32 0, %v1348
        %v1350 = vrot.slane %v1233, %v1349
        %v1351 = vlaneseq
        %v1352 = vshrl.u32 %v1351, 7
        %v1353 = vsub.s32 0, %v1352
        %v1354 = vrot.slane %v1216, %v1353
        %v1355 = vlaneseq
        %v1356 = vshrl.u32 %v1355, 7
        %v1357 = vsub.s32 0, %v1356
        %v1358 = vrot.slane %v1230, %v1357
        %v1359 = vlaneseq
        %v1360 = vshrl.u32 %v1359, 7
        %v1361 = vsub.s32 0, %v1360
        %v1362 = vrot.slane %v1232, %v1361
        %v1363 = vlaneseq
        %v1364 = vshrl.u32 %v1363, 7
        %v1365 = vsub.s32 0, %v1364
        %v1366 = vrot.slane %v1234, %v1365
        %v1375 = vlaneseq
        %v1376 = vshrl.u32 %v1375, 7
        %v1377 = vsub.s32 0, %v1376
        %v1378 = vrot.slane %v1259, %v1377
        %v1379 = vlaneseq
        %v1380 = vshrl.u32 %v1379, 7
        %v1381 = vsub.s32 0, %v1380
        %v1382 = vrot.slane %v1273, %v1381
        %v1383 = vlaneseq
        %v1384 = vshrl.u32 %v1383, 7
        %v1385 = vsub.s32 0, %v1384
        %v1386 = vrot.slane %v1281, %v1385
        %v1387 = vlaneseq
        %v1388 = vshrl.u32 %v1387, 7
        %v1389 = vsub.s32 0, %v1388
        %v1390 = vrot.slane %v1283, %v1389
        %v1391 = vlaneseq
        %v1392 = vshrl.u32 %v1391, 7
        %v1393 = vsub.s32 0, %v1392
        %v1394 = vrot.slane %v1266, %v1393
        %v1395 = vlaneseq
        %v1396 = vshrl.u32 %v1395, 7
        %v1397 = vsub.s32 0, %v1396
        %v1398 = vrot.slane %v1280, %v1397
        %v1399 = vlaneseq
        %v1400 = vshrl.u32 %v1399, 7
        %v1401 = vsub.s32 0, %v1400
        %v1402 = vrot.slane %v1282, %v1401
        %v1403 = vlaneseq
        %v1404 = vshrl.u32 %v1403, 7
        %v1405 = vsub.s32 0, %v1404
        %v1406 = vrot.slane %v1284, %v1405
        %v1415 = vlaneseq
        %v1416 = vshrl.u32 %v1415, 7
        %v1417 = vsub.s32 0, %v1416
        %v1418 = vrot.slane %v1309, %v1417
        %v1419 = vlaneseq
        %v1420 = vshrl.u32 %v1419, 7
        %v1421 = vsub.s32 0, %v1420
        %v1422 = vrot.slane %v1323, %v1421
        %v1423 = vlaneseq
        %v1424 = vshrl.u32 %v1423, 7
        %v1425 = vsub.s32 0, %v1424
        %v1426 = vrot.slane %v1331, %v1425
        %v1427 = vlaneseq
        %v1428 = vshrl.u32 %v1427, 7
        %v1429 = vsub.s32 0, %v1428
        %v1430 = vrot.slane %v1333, %v1429
        %v1431 = vlaneseq
        %v1432 = vshrl.u32 %v1431, 7
        %v1433 = vsub.s32 0, %v1432
        %v1434 = vrot.slane %v1316, %v1433
        %v1435 = vlaneseq
        %v1436 = vshrl.u32 %v1435, 7
        %v1437 = vsub.s32 0, %v1436
        %v1438 = vrot.slane %v1330, %v1437
        %v1439 = vlaneseq
        %v1440 = vshrl.u32 %v1439, 7
        %v1441 = vsub.s32 0, %v1440
        %v1442 = vrot.slane %v1332, %v1441
        %v1443 = vlaneseq
        %v1444 = vshrl.u32 %v1443, 7
        %v1445 = vsub.s32 0, %v1444
        %v1446 = vrot.slane %v1334, %v1445
        %vm1455 = vcmask 1040384
        %v1456 = vsel %vm1455, %v1151, %v1338
        %v1457 = vsel %vm1455, %v1165, %v1342
        %v1458 = vsel %vm1455, %v1173, %v1346
        %v1459 = vsel %vm1455, %v1175, %v1350
        %v1460 = vsel %vm1455, %v1158, %v1354
        %v1461 = vsel %vm1455, %v1172, %v1358
        %v1462 = vsel %vm1455, %v1174, %v1362
        %v1463 = vsel %vm1455, %v1176, %v1366
        %vm1464 = vcmask 1041408
        %v1465 = vsel %vm1464, %v1456, %v1378
        %v1466 = vsel %vm1464, %v1457, %v1382
        %v1467 = vsel %vm1464, %v1458, %v1386
        %v1468 = vsel %vm1464, %v1459, %v1390
        %v1469 = vsel %vm1464, %v1460, %v1394
        %v1470 = vsel %vm1464, %v1461, %v1398
        %v1471 = vsel %vm1464, %v1462, %v1402
        %v1472 = vsel %vm1464, %v1463, %v1406
        %vm1473 = vcmask 1042432
        %v1474 = vsel %vm1473, %v1465, %v1418
        %v1475 = vsel %vm1473, %v1466, %v1422
        %v1476 = vsel %vm1473, %v1467, %v1426
        %v1477 = vsel %vm1473, %v1468, %v1430
        %v1478 = vsel %vm1473, %v1469, %v1434
        %v1479 = vsel %vm1473, %v1470, %v1438
        %v1480 = vsel %vm1473, %v1471, %v1442
        %v1481 = vsel %vm1473, %v1472, %v1446
        %vm1482 = vcmask 60416
        %1483 = vst.msk [vmem:[%s500] sm:$0xf] %vm1482, %v1474
        %1484 = vst.msk [vmem:[%s500 + $0x4] sm:$0xf] %vm1482, %v1475
        %1485 = vst.msk [vmem:[%s500 + $0x8] sm:$0xf] %vm1482, %v1476
        %1486 = vst.msk [vmem:[%s500 + $0xc] sm:$0xf] %vm1482, %v1477
        %1487 = vst.msk [vmem:[%s500 + $0x10] sm:$0xf] %vm1482, %v1478
        %1488 = vst.msk [vmem:[%s500 + $0x14] sm:$0xf] %vm1482, %v1479
        %1489 = vst.msk [vmem:[%s500 + $0x18] sm:$0xf] %vm1482, %v1480
        %1490 = vst.msk [vmem:[%s500 + $0x1c] sm:$0xf] %vm1482, %v1481
        %v1491 = vmul.f32 %v1126, 0.25
        %v1493 = vsel %vm765, %v1491, 0
        %1495 = vmatprep.subr.mxu0 0.0
        %1496 = vmatpush1.msra.mxu0 %v762
        %1497 = vmatprep.subr.mxu0 0.0
        %1498 = vmatpush1.msra.mxu0 0.0
        %1499 = vmatprep.subr.mxu0 0.0
        %1500 = vmatpush1.msra.mxu0 0.0
        %1501 = vmatprep.subr.mxu0 0.0
        %1502 = vmatpush1.msra.mxu0 0.0
        %1503 = vmatprep.subr.mxu0 0.0
        %1504 = vmatpush1.msra.mxu0 0.0
        %1505 = vmatprep.subr.mxu0 0.0
        %1506 = vmatpush1.msra.mxu0 0.0
        %1507 = vmatprep.subr.mxu0 0.0
        %1508 = vmatpush1.msra.mxu0 0.0
        %1509 = vmatprep.subr.mxu0 0.0
        %1510 = vmatpush1.msra.mxu0 0.0
        %1511 = vmatprep.subr.mxu0 0.0
        %1512 = vmatpush1.msra.mxu0 0.0
        %1513 = vmatprep.subr.mxu0 0.0
        %1514 = vmatpush1.msra.mxu0 0.0
        %1515 = vmatprep.subr.mxu0 0.0
        %1516 = vmatpush1.msra.mxu0 0.0
        %1517 = vmatprep.subr.mxu0 0.0
        %1518 = vmatpush1.msra.mxu0 0.0
        %1519 = vmatprep.subr.mxu0 0.0
        %1520 = vmatpush1.msra.mxu0 0.0
        %1521 = vmatprep.subr.mxu0 0.0
        %1522 = vmatpush1.msra.mxu0 0.0
        %1523 = vmatprep.subr.mxu0 0.0
        %1524 = vmatpush1.msra.mxu0 0.0
        %1525 = vmatprep.subr.mxu0 0.0
        %1526 = vmatpush1.msra.mxu0 0.0
        %1527 = vmatprep.subr.mxu0 0.0
        %1528 = vmatpush1.msra.mxu0 0.0
        %1529 = vmatprep.subr.mxu0 0.0
        %1530 = vmatpush1.msra.mxu0 0.0
        %1531 = vmatprep.subr.mxu0 0.0
        %1532 = vmatpush1.msra.mxu0 0.0
        %1533 = vmatprep.subr.mxu0 0.0
        %1534 = vmatpush1.msra.mxu0 0.0
        %1535 = vmatprep.subr.mxu0 0.0
        %1536 = vmatpush1.msra.mxu0 0.0
        %1537 = vmatprep.subr.mxu0 0.0
        %1538 = vmatpush1.msra.mxu0 0.0
        %1539 = vmatprep.subr.mxu0 0.0
        %1540 = vmatpush1.msra.mxu0 0.0
        %1541 = vmatprep.subr.mxu0 0.0
        %1542 = vmatpush1.msra.mxu0 0.0
        %1543 = vmatprep.subr.mxu0 0.0
        %1544 = vmatpush1.msra.mxu0 0.0
        %1545 = vmatprep.subr.mxu0 0.0
        %1546 = vmatpush1.msra.mxu0 0.0
        %1547 = vmatprep.subr.mxu0 0.0
        %1548 = vmatpush1.msra.mxu0 0.0
        %1549 = vmatprep.subr.mxu0 0.0
        %1550 = vmatpush1.msra.mxu0 0.0
        %1551 = vmatprep.subr.mxu0 0.0
        %1552 = vmatpush1.msra.mxu0 0.0
        %1553 = vmatprep.subr.mxu0 0.0
        %1554 = vmatpush1.msra.mxu0 0.0
        %1555 = vmatprep.subr.mxu0 0.0
        %1556 = vmatpush1.msra.mxu0 0.0
        %1557 = vmatprep.subr.mxu0 0.0
        %1558 = vmatpush1.msra.mxu0 0.0
        %1559 = vmatprep.mubr.f32.mxu0 0.0
        %1560 = vmatmul.mubr.f32.gmra.mrb[0].mxu0 %v1493
        %v1561 = vpop.f32.mrb[0].mxu0
        %v1562 = vadd.f32 0.0, %v1561
        %v1563 = vpop.f32.mrb[0].mxu0
        %1564 = vdwg.mxu0
        %v1565 = vld [vmem:[%s9] sm:$0xff]
        %v1567 = vsel %vm765, %v1562, 0
        %1569 = vmatprep.subr.mxu0 0.0
        %1570 = vmatpush1.msra.mxu0 %v1565
        %1571 = vmatprep.subr.mxu0 0.0
        %1572 = vmatpush1.msra.mxu0 0.0
        %1573 = vmatprep.subr.mxu0 0.0
        %1574 = vmatpush1.msra.mxu0 0.0
        %1575 = vmatprep.subr.mxu0 0.0
        %1576 = vmatpush1.msra.mxu0 0.0
        %1577 = vmatprep.subr.mxu0 0.0
        %1578 = vmatpush1.msra.mxu0 0.0
        %1579 = vmatprep.subr.mxu0 0.0
        %1580 = vmatpush1.msra.mxu0 0.0
        %1581 = vmatprep.subr.mxu0 0.0
        %1582 = vmatpush1.msra.mxu0 0.0
        %1583 = vmatprep.subr.mxu0 0.0
        %1584 = vmatpush1.msra.mxu0 0.0
        %1585 = vmatprep.subr.mxu0 0.0
        %1586 = vmatpush1.msra.mxu0 0.0
        %1587 = vmatprep.subr.mxu0 0.0
        %1588 = vmatpush1.msra.mxu0 0.0
        %1589 = vmatprep.subr.mxu0 0.0
        %1590 = vmatpush1.msra.mxu0 0.0
        %1591 = vmatprep.subr.mxu0 0.0
        %1592 = vmatpush1.msra.mxu0 0.0
        %1593 = vmatprep.subr.mxu0 0.0
        %1594 = vmatpush1.msra.mxu0 0.0
        %1595 = vmatprep.subr.mxu0 0.0
        %1596 = vmatpush1.msra.mxu0 0.0
        %1597 = vmatprep.subr.mxu0 0.0
        %1598 = vmatpush1.msra.mxu0 0.0
        %1599 = vmatprep.subr.mxu0 0.0
        %1600 = vmatpush1.msra.mxu0 0.0
        %1601 = vmatprep.subr.mxu0 0.0
        %1602 = vmatpush1.msra.mxu0 0.0
        %1603 = vmatprep.subr.mxu0 0.0
        %1604 = vmatpush1.msra.mxu0 0.0
        %1605 = vmatprep.subr.mxu0 0.0
        %1606 = vmatpush1.msra.mxu0 0.0
        %1607 = vmatprep.subr.mxu0 0.0
        %1608 = vmatpush1.msra.mxu0 0.0
        %1609 = vmatprep.subr.mxu0 0.0
        %1610 = vmatpush1.msra.mxu0 0.0
        %1611 = vmatprep.subr.mxu0 0.0
        %1612 = vmatpush1.msra.mxu0 0.0
        %1613 = vmatprep.subr.mxu0 0.0
        %1614 = vmatpush1.msra.mxu0 0.0
        %1615 = vmatprep.subr.mxu0 0.0
        %1616 = vmatpush1.msra.mxu0 0.0
        %1617 = vmatprep.subr.mxu0 0.0
        %1618 = vmatpush1.msra.mxu0 0.0
        %1619 = vmatprep.subr.mxu0 0.0
        %1620 = vmatpush1.msra.mxu0 0.0
        %1621 = vmatprep.subr.mxu0 0.0
        %1622 = vmatpush1.msra.mxu0 0.0
        %1623 = vmatprep.subr.mxu0 0.0
        %1624 = vmatpush1.msra.mxu0 0.0
        %1625 = vmatprep.subr.mxu0 0.0
        %1626 = vmatpush1.msra.mxu0 0.0
        %1627 = vmatprep.subr.mxu0 0.0
        %1628 = vmatpush1.msra.mxu0 0.0
        %1629 = vmatprep.subr.mxu0 0.0
        %1630 = vmatpush1.msra.mxu0 0.0
        %1631 = vmatprep.subr.mxu0 0.0
        %1632 = vmatpush1.msra.mxu0 0.0
        %1633 = vmatprep.mubr.f32.mxu0 0.0
        %1634 = vmatmul.mubr.f32.gmra.mrb[0].mxu0 %v1567
        %v1635 = vpop.f32.mrb[0].mxu0
        %v1636 = vadd.f32 0.0, %v1635
        %v1637 = vpop.f32.mrb[0].mxu0
        %1638 = vdwg.mxu0
        %1639 = vst.msk [vmem:[%s493] sm:$0xff] %vm523, %v1636
        %s1640 = sand.u32 %s284, 1
        %s1641 = scalar_lea.sflag [#allocation4], %s1640
        %s1642 = sand.u32 %s284, 1
        %s1643 = smul.addr %s1642, 8
        %s1644 = scalar_lea.vmem [#allocation8], %s1643
        %s1645 = sand.u32 %s312, 1
        %s1646 = scalar_lea.sflag [#allocation10], %s1645
        %s1647 = sand.u32 %s312, 1
        %s1648 = smul.addr %s1647, 32
        %s1649 = scalar_lea.vmem [#allocation9], %s1648
        // Predicated region
        $region73: #{tpu_custom_call.1} parent=59 // pred_check
          %p1650 = pneg %p294
        $region74: #{tpu_custom_call.1} parent=59 // pred_check_branch
          %1652 = sbr.rel (%p1650) target = $region76
        $region75: #{tpu_custom_call.1} parent=59 // pred_region
          %s1654 = ssub.s32 128, 128
          %1655 = vsyncadd %s1641, %s1654
          %s1656 = sadd.s32 %s40, %s39
          %s1657 = smul.addr %s1656, 128
          %s1658 = scalar_lea.hbm %s10, %s1657
          %s1660 = sshll.u32 %s1644, 4
          %s1661 = int_to_ptr.vmem [resolvable:$true] %s1660
          %1663 = dma.vmem_to_hbm [thread:$0]  %s1661, 128, %s1658, %s1641
        $region76: #{tpu_custom_call.1} parent=59 // pred_fallthru
          _
        // Predicated region
        $region77: #{tpu_custom_call.1} parent=59 // pred_check
          %p1664 = pneg %p322
        $region78: #{tpu_custom_call.1} parent=59 // pred_check_branch
          %1666 = sbr.rel (%p1664) target = $region80
        $region79: #{tpu_custom_call.1} parent=59 // pred_region
          %s1667 = smul.u32 8, %s40
          %s1669 = ssub.s32 512, 512
          %1670 = vsyncadd %s1646, %s1669
          %s1671 = smul.addr %s39, 8
          %s1672 = sadd.s32 %s1667, %s1671
          %s1673 = smul.addr %s1672, 64
          %s1674 = scalar_lea.hbm %s11, %s1673
          %s1675 = sshll.u32 %s1649, 4
          %s1676 = int_to_ptr.vmem [resolvable:$true] %s1675
          %1681 = dma.vmem_to_hbm [thread:$0]  %s1676, 512, %s1674, %s1646, 64, 64, 4
        $region80: #{tpu_custom_call.1} parent=59 // pred_fallthru
          _
      $region60: #{tpu_custom_call.1} parent=5 // pred_fallthru
        _
      %p1682 = scmp.le.s32.totalorder 2, %s30
      // Predicated region
      $region81: #{tpu_custom_call.1} parent=5 // pred_check
        %p1683 = pneg %p1682
      $region82: #{tpu_custom_call.1} parent=5 // pred_check_branch
        %1685 = sbr.rel (%p1683) target = $region84
      $region83: #{tpu_custom_call.1} parent=5 // pred_region
        %s1686 = ssub.s32 %s30, 2
        // Predicated region
        $region85: #{tpu_custom_call.1} parent=83 // pred_check
          %p1687 = pneg %p300
        $region86: #{tpu_custom_call.1} parent=83 // pred_check_branch
          %1689 = sbr.rel (%p1687) target = $region88
        $region87: #{tpu_custom_call.1} parent=83 // pred_region
          %s1690 = sand.u32 %s285, 1
          %s1691 = scalar_lea.sflag [#allocation4], %s1690
          %s1692 = sand.u32 %s285, 1
          %s1693 = smul.addr %s1692, 8
          %s1694 = scalar_lea.vmem [#allocation8], %s1693
          %1695 = dma.done %s1691, 128
        $region88: #{tpu_custom_call.1} parent=83 // pred_fallthru
          _
        // Predicated region
        $region89: #{tpu_custom_call.1} parent=83 // pred_check
          %p1696 = pneg %p328
        $region90: #{tpu_custom_call.1} parent=83 // pred_check_branch
          %1698 = sbr.rel (%p1696) target = $region92
        $region91: #{tpu_custom_call.1} parent=83 // pred_region
          %s1699 = sand.u32 %s313, 1
          %s1700 = scalar_lea.sflag [#allocation10], %s1699
          %s1701 = sand.u32 %s313, 1
          %s1702 = smul.addr %s1701, 32
          %s1703 = scalar_lea.vmem [#allocation9], %s1702
          %1704 = dma.done %s1700, 512
        $region92: #{tpu_custom_call.1} parent=83 // pred_fallthru
          _
      $region84: #{tpu_custom_call.1} parent=5 // pred_fallthru
        _
    $region6: #{tpu_custom_call.1} parent=1 // loop_footer
      %s34 = sadd.s32 1, %s30
    $region7: #{tpu_custom_call.1} parent=1 // loop_footer_branch
      %29 = sbr.rel target = $region3
    $region8: #{tpu_custom_call.1} parent=1 // loop_exit
      _
    %1705 = vsyncpa [#allocation3], 1
    %s1706 = scalar_lea.sflag [#allocation3], 1
    %1707 = vsyncpa %s1706, 1
    %1708 = vsyncpa [#allocation6], 1
    %s1709 = scalar_lea.sflag [#allocation6], 1
    %1710 = vsyncpa %s1709, 1
    %1711 = vsyncpa [#allocation4], 1
    %s1712 = scalar_lea.sflag [#allocation4], 1
    %1713 = vsyncpa %s1712, 1
    %1714 = vsyncpa [#allocation10], 1
    %s1715 = scalar_lea.sflag [#allocation10], 1
    %1716 = vsyncpa %s1715, 1

</llo_original>
